<compile_context>
chip_gen: v6e
topology: v6e:2x2x1
jax: 0.10.0
libtpu: 0.0.40
codegen_flags: <defaults>
</compile_context>

<pallas_src>
import jax
import jax.numpy as jnp
from jax import lax
from jax.experimental import pallas as pl
from jax.experimental.pallas import tpu as pltpu


_LANE = 128


def _round_up(x, m):
    return (x + m - 1) // m * m


def _egnn_layer_kernel(idx_send_ref, idx_rec_shift_ref, idx_rec_row_ref,
                       edge_ref, table_ref, w1e_ref, b1_ref,
                       w2_ref, b2_ref, we_ref, be_ref, out_ref):
    e_step = pl.program_id(1)

    # Output block is resident across the edge axis -> init once per split.
    @pl.when(e_step == 0)
    def _init():
        out_ref[...] = jnp.zeros_like(out_ref)

    te = idx_send_ref.shape[0]          # edge tile
    n_tab = table_ref.shape[0]          # padded (#senders + #receivers)
    n_out = out_ref.shape[0]            # padded #receivers

    # ---- fused gather (W1_send/W1_rec already folded into `table`):
    #   xs_w[index_send] + xr_w[index_rec]  ==  two_hot @ table
    # Exact (weights are 0/1); padded edges (idx = -1) hit no column.
    idx_s = idx_send_ref[...]                                    # (TE, 1) int32
    idx_r = idx_rec_shift_ref[...]                               # (TE, 1) +nsp offset
    col = lax.broadcasted_iota(jnp.int32, (te, n_tab), 1)
    two_hot = ((idx_s == col) | (idx_r == col)).astype(jnp.bfloat16)   # (TE, NTAB)

    # ---- message MLP layer 1 (split-W: gather term + edge term + bias)
    h = jnp.dot(two_hot, table_ref[...], preferred_element_type=jnp.float32)
    h = h + jnp.dot(edge_ref[...], w1e_ref[...],
                    preferred_element_type=jnp.float32)
    h = h + b1_ref[...]
    h = h * jax.nn.sigmoid(h)                                    # SiLU (f32, EUP)

    # ---- message MLP layer 2
    m = jnp.dot(h.astype(jnp.bfloat16), w2_ref[...],
                preferred_element_type=jnp.float32) + b2_ref[...]
    m = m * jax.nn.sigmoid(m)                                    # (TE, HP) f32

    # ---- edge_inf_mlp: Linear(H -> 1) + Sigmoid as VPU multiply + lane reduce
    ew = jax.nn.sigmoid(
        jnp.sum(m * we_ref[...], axis=-1, keepdims=True) + be_ref[...])  # (TE,1)
    weighted = (m * ew).astype(jnp.bfloat16)                     # (TE, HP)

    # ---- scatter_add over index_rec: pre-transposed one-hot (receiver rows on
    # the sublane axis) -> plain (N, TE) @ (TE, HP) MXU matmul, no transpose.
    rows = lax.broadcasted_iota(jnp.int32, (n_out, te), 0)
    oh_scatter = (idx_rec_row_ref[...] == rows).astype(jnp.bfloat16)     # (N, TE)
    out_ref[...] += jnp.dot(oh_scatter, weighted,
                            preferred_element_type=jnp.float32)


def _pad2(a, rows, cols, dtype):
    out = jnp.zeros((rows, cols), dtype)
    return out.at[:a.shape[0], :a.shape[1]].set(a.astype(dtype))


def _pad_idx(idx, n):
    out = jnp.full((n,), -1, jnp.int32)   # -1 == "padded edge", dropped by one-hot
    return out.at[:idx.shape[0]].set(idx.astype(jnp.int32))


def simplicial_egnn_layer(x, index, edge_attr, params, *,
                          edge_tile=1024, edge_splits=2):
    """Pallas implementation of SimplicialEGNNLayer.forward."""
    x_send, x_rec = x
    index_send, index_rec = index
    w1, b1, w2, b2, we, be = params

    n_send, num_hidden = x_send.shape
    n_rec = x_rec.shape[0]
    n_edges, num_inv = edge_attr.shape

    # padded sizes (lane-dense features; sublane-aligned node/receiver rows)
    hp = _round_up(num_hidden, _LANE)
    nsp = _round_up(n_send, 8)
    nrp = _round_up(n_rec, 8)
    n_out = _round_up(n_rec, 8)

    te = min(edge_tile, _round_up(n_edges, _LANE))
    total_tiles = pl.cdiv(n_edges, te)
    splits = max(1, min(edge_splits, total_tiles))
    tiles_per_split = pl.cdiv(total_tiles, splits)
    ep = splits * tiles_per_split * te
    grid = (splits, tiles_per_split)

    # ---- wrapper-side packing (layout plumbing + O(N*H^2) W1 fold) ----------
    f32 = jnp.float32
    xs_w = x_send.astype(f32) @ w1[:num_hidden].astype(f32)              # (Ns, H)
    xr_w = x_rec.astype(f32) @ w1[num_hidden:2 * num_hidden].astype(f32)  # (Nr, H)
    table = jnp.zeros((nsp + nrp, hp), jnp.bfloat16)
    table = table.at[:n_send, :num_hidden].set(xs_w.astype(jnp.bfloat16))
    table = table.at[nsp:nsp + n_rec, :num_hidden].set(xr_w.astype(jnp.bfloat16))

    edge_p = jnp.zeros((ep, num_inv), jnp.bfloat16)
    edge_p = edge_p.at[:n_edges].set(edge_attr.astype(jnp.bfloat16))

    w1e = _pad2(w1[2 * num_hidden:], num_inv, hp, jnp.bfloat16)          # (inv, HP)
    b1p = _pad2(b1.reshape(1, -1), 1, hp, f32)
    w2p = _pad2(w2, hp, hp, jnp.bfloat16)
    b2p = _pad2(b2.reshape(1, -1), 1, hp, f32)
    wep = _pad2(we.reshape(1, -1), 1, hp, f32)                           # edge_inf row
    bep = jnp.asarray(be, f32).reshape(1, 1)

    isend = _pad_idx(index_send, ep).reshape(ep, 1)
    irec = _pad_idx(index_rec, ep)
    irec_shift = jnp.where(irec >= 0, irec + nsp, -1).astype(jnp.int32).reshape(ep, 1)
    irec_row = irec.reshape(1, ep)

    # ---- chip-aware VMEM budget (≈32 MiB on v7x, 64 MiB on v5e/v6e) --------
    try:
        vmem_cap = int(pltpu.get_tpu_info().vmem_capacity_bytes)
    except Exception:
        vmem_cap = 128 * 1024 * 1024
    vmem_limit = min(vmem_cap // 2, 64 * 1024 * 1024)

    # ---- cost estimate for the restructured (non-redundant) schedule --------
    steps = splits * tiles_per_split
    flops = int(steps * (2 * te * (nsp + nrp) * hp      # two-hot gather
                         + 2 * te * num_inv * hp        # edge_attr @ W1_edge
                         + 2 * te * hp * hp             # @ W2
                         + 2 * n_out * te * hp))        # scatter matmul
    transcendentals = int(steps * te * (2 * hp + 1))
    ins = (isend, irec_shift, irec_row, edge_p, table, w1e, b1p, w2p, b2p, wep, bep)
    bytes_accessed = int(sum(a.size * a.dtype.itemsize for a in ins)
                         + splits * n_out * hp * 4)

    out = pl.pallas_call(
        _egnn_layer_kernel,
        out_shape=jax.ShapeDtypeStruct((splits, n_out, hp), jnp.float32),
        grid_spec=pltpu.PrefetchScalarGridSpec(
            num_scalar_prefetch=0,
            grid=grid,
            in_specs=[
                pl.BlockSpec((te, 1), lambda c, e: (c * tiles_per_split + e, 0)),
                pl.BlockSpec((te, 1), lambda c, e: (c * tiles_per_split + e, 0)),
                pl.BlockSpec((1, te), lambda c, e: (0, c * tiles_per_split + e)),
                pl.BlockSpec((te, num_inv),
                             lambda c, e: (c * tiles_per_split + e, 0)),
                pl.BlockSpec((nsp + nrp, hp), lambda c, e: (0, 0)),   # node table
                pl.BlockSpec((num_inv, hp), lambda c, e: (0, 0)),     # W1_edge
                pl.BlockSpec((1, hp), lambda c, e: (0, 0)),           # b1
                pl.BlockSpec((hp, hp), lambda c, e: (0, 0)),          # W2
                pl.BlockSpec((1, hp), lambda c, e: (0, 0)),           # b2
                pl.BlockSpec((1, hp), lambda c, e: (0, 0)),           # we (row)
                pl.BlockSpec((1, 1), lambda c, e: (0, 0)),            # be
            ],
            out_specs=pl.BlockSpec((None, n_out, hp), lambda c, e: (c, 0, 0)),
        ),
        compiler_params=pltpu.CompilerParams(
            dimension_semantics=("parallel", "arbitrary"),
            vmem_limit_bytes=vmem_limit),
        cost_estimate=pl.CostEstimate(flops=flops,
                                      transcendentals=transcendentals,
                                      bytes_accessed=bytes_accessed),
    )(isend, irec_shift, irec_row, edge_p, table, w1e, b1p, w2p, b2p, wep, bep)

    out = out.sum(axis=0) if splits > 1 else out[0]
    return out[:n_rec, :num_hidden]


def _init_linear(key, fan_in, fan_out):
    # matches torch.nn.Linear default init (uniform +/- 1/sqrt(fan_in)),
    # stored as (in, out) so the layer computes x @ W + b.
    kw, kb = jax.random.split(key)
    bound = 1.0 / jnp.sqrt(jnp.float32(fan_in))
    w = jax.random.uniform(kw, (fan_in, fan_out), jnp.float32, -bound, bound)
    b = jax.random.uniform(kb, (fan_out,), jnp.float32, -bound, bound)
    return w, b


def _reference(x, index, edge_attr, params):
    """Pure-JAX f32 reference mirroring the PyTorch forward."""
    x_send, x_rec = x
    index_send, index_rec = index
    w1, b1, w2, b2, we, be = params
    sim_send = x_send[index_send]
    sim_rec = x_rec[index_rec]
    state = jnp.concatenate([sim_send, sim_rec, edge_attr], axis=1)
    h = jax.nn.silu(state @ w1 + b1)
    m = jax.nn.silu(h @ w2 + b2)
    ew = jax.nn.sigmoid(m @ we + be)
    return jax.ops.segment_sum(m * ew, index_rec, num_segments=x_rec.shape[0])


if __name__ == "__main__":
    num_hidden = 32
    num_inv = 8
    n_send, n_rec, n_edges = 16, 16, 32

    key = jax.random.PRNGKey(0)
    k = jax.random.split(key, 8)

    x_send = jax.random.normal(k[0], (n_send, num_hidden), jnp.float32)
    x_rec = jax.random.normal(k[1], (n_rec, num_hidden), jnp.float32)
    edge_attr = jax.random.normal(k[2], (n_edges, num_inv), jnp.float32)
    index_send = jax.random.randint(k[3], (n_edges,), 0, n_send, jnp.int32)
    index_rec = jax.random.randint(k[4], (n_edges,), 0, n_rec, jnp.int32)

    # message_mlp: Linear(2H+inv -> H), SiLU, Linear(H -> H), SiLU
    w1, b1 = _init_linear(k[5], 2 * num_hidden + num_inv, num_hidden)
    w2, b2 = _init_linear(k[6], num_hidden, num_hidden)
    # edge_inf_mlp: Linear(H -> 1), Sigmoid
    we, be = _init_linear(k[7], num_hidden, 1)
    params = (w1, b1, w2, b2, we, be)

    out = simplicial_egnn_layer((x_send, x_rec), (index_send, index_rec),
                                edge_attr, params)
    out = jax.block_until_ready(out)

    ref = _reference((x_send, x_rec), (index_send, index_rec), edge_attr, params)
    assert out.shape == (n_rec, num_hidden)
    # bf16 MXU operands (f32 accumulation) -> compare with a bf16-appropriate bound.
    rel_err = float(jnp.max(jnp.abs(out - ref)) / (jnp.max(jnp.abs(ref)) + 1e-6))
    assert rel_err < 5e-2, f"mismatch vs reference, rel_err={rel_err}"
    print("KERNEL_OK")
</pallas_src>

<mosaic_0001>
module attributes {stable_mosaic.version = 11 : i64} {
  func.func @_egnn_layer_kernel(%arg0: i32, %arg1: i32, %arg2: memref<128x1xi32, #tpu.memory_space<vmem>>, %arg3: memref<128x1xi32, #tpu.memory_space<vmem>>, %arg4: memref<1x128xi32, #tpu.memory_space<vmem>>, %arg5: memref<128x8xbf16, #tpu.memory_space<vmem>>, %arg6: memref<32x128xbf16, #tpu.memory_space<vmem>>, %arg7: memref<8x128xbf16, #tpu.memory_space<vmem>>, %arg8: memref<1x128xf32, #tpu.memory_space<vmem>>, %arg9: memref<128x128xbf16, #tpu.memory_space<vmem>>, %arg10: memref<1x128xf32, #tpu.memory_space<vmem>>, %arg11: memref<1x128xf32, #tpu.memory_space<vmem>>, %arg12: memref<1x1xf32, #tpu.memory_space<vmem>>, %arg13: memref<1x16x128xf32, #tpu.memory_space<vmem>>) attributes {dimension_semantics = [#tpu.dimension_semantics<parallel>, #tpu.dimension_semantics<arbitrary>], iteration_bounds = array<i64: 1, 1>, scalar_prefetch = 0 : i64, scratch_operands = 0 : i64, tpu.core_type = #tpu.core_type<tc>, window_params = [{transform_indices = @transform_0, window_bounds = array<i64: 128, 1>}, {transform_indices = @transform_1, window_bounds = array<i64: 128, 1>}, {transform_indices = @transform_2, window_bounds = array<i64: 1, 128>}, {transform_indices = @transform_3, window_bounds = array<i64: 128, 8>}, {pipeline_mode = #tpu.pipeline_mode<synchronous>, transform_indices = @transform_4, window_bounds = array<i64: 32, 128>}, {pipeline_mode = #tpu.pipeline_mode<synchronous>, transform_indices = @transform_5, window_bounds = array<i64: 8, 128>}, {pipeline_mode = #tpu.pipeline_mode<synchronous>, transform_indices = @transform_6, window_bounds = array<i64: 1, 128>}, {pipeline_mode = #tpu.pipeline_mode<synchronous>, transform_indices = @transform_7, window_bounds = array<i64: 128, 128>}, {pipeline_mode = #tpu.pipeline_mode<synchronous>, transform_indices = @transform_8, window_bounds = array<i64: 1, 128>}, {pipeline_mode = #tpu.pipeline_mode<synchronous>, transform_indices = @transform_9, window_bounds = array<i64: 1, 128>}, {pipeline_mode = #tpu.pipeline_mode<synchronous>, transform_indices = @transform_10, window_bounds = array<i64: 1, 1>}, {transform_indices = @transform_11, window_bounds = array<i64: 1, 16, 128>}]} {
    %c0_i32 = arith.constant 0 : i32
    %0 = arith.cmpi eq, %arg1, %c0_i32 : i32
    %1 = arith.extui %0 : i1 to i32
    %c0_i32_0 = arith.constant 0 : i32
    %2 = arith.cmpi ne, %1, %c0_i32_0 : i32
    scf.if %2 {
      %cst_35 = arith.constant 0.000000e+00 : f32
      %71 = vector.broadcast %cst_35 : f32 to vector<16x128xf32>
      %c0_36 = arith.constant 0 : index
      %c0_37 = arith.constant 0 : index
      %c0_38 = arith.constant 0 : index
      %72 = vector.load %arg13[%c0_36, %c0_37, %c0_38] : memref<1x16x128xf32, #tpu.memory_space<vmem>>, vector<1x16x128xf32>
      %73 = vector.shape_cast %72 : vector<1x16x128xf32> to vector<16x128xf32>
      %74 = vector.shape_cast %71 : vector<16x128xf32> to vector<1x16x128xf32>
      tpu.vector_store %arg13[%c0_36, %c0_37, %c0_38], %74 {strides = array<i32>} : memref<1x16x128xf32, #tpu.memory_space<vmem>>, vector<1x16x128xf32>,
    } else {
    }
    %c0 = arith.constant 0 : index
    %c0_1 = arith.constant 0 : index
    %3 = vector.load %arg2[%c0, %c0_1] : memref<128x1xi32, #tpu.memory_space<vmem>>, vector<128x1xi32>
    %c0_2 = arith.constant 0 : index
    %c0_3 = arith.constant 0 : index
    %4 = vector.load %arg3[%c0_2, %c0_3] : memref<128x1xi32, #tpu.memory_space<vmem>>, vector<128x1xi32>
    %5 = tpu.iota {dimensions = array<i32: 1>} : vector<128x32xi32>
    %6 = vector.broadcast %3 : vector<128x1xi32> to vector<128x32xi32>
    %7 = arith.cmpi eq, %6, %5 : vector<128x32xi32>
    %8 = vector.broadcast %4 : vector<128x1xi32> to vector<128x32xi32>
    %9 = arith.cmpi eq, %8, %5 : vector<128x32xi32>
    %10 = arith.ori %7, %9 : vector<128x32xi1>
    %11 = arith.extui %10 : vector<128x32xi1> to vector<128x32xi32>
    %12 = arith.sitofp %11 : vector<128x32xi32> to vector<128x32xf32>
    %13 = arith.truncf %12 : vector<128x32xf32> to vector<128x32xbf16>
    %c0_4 = arith.constant 0 : index
    %c0_5 = arith.constant 0 : index
    %14 = vector.load %arg6[%c0_4, %c0_5] : memref<32x128xbf16, #tpu.memory_space<vmem>>, vector<32x128xbf16>
    %cst = arith.constant dense<0.000000e+00> : vector<128x128xf32>
    %15 = tpu.matmul %13, %14, %cst {dimension_numbers = #tpu.dot_dimension_numbers<[1], [0], [0], [1], [0, 0, 1, 1], [], []>} : vector<128x32xbf16>, vector<32x128xbf16>, vector<128x128xf32> -> vector<128x128xf32>
    %c0_6 = arith.constant 0 : index
    %c0_7 = arith.constant 0 : index
    %16 = vector.load %arg5[%c0_6, %c0_7] : memref<128x8xbf16, #tpu.memory_space<vmem>>, vector<128x8xbf16>
    %c0_8 = arith.constant 0 : index
    %c0_9 = arith.constant 0 : index
    %17 = vector.load %arg7[%c0_8, %c0_9] : memref<8x128xbf16, #tpu.memory_space<vmem>>, vector<8x128xbf16>
    %cst_10 = arith.constant dense<0.000000e+00> : vector<128x128xf32>
    %18 = tpu.matmul %16, %17, %cst_10 {dimension_numbers = #tpu.dot_dimension_numbers<[1], [0], [0], [1], [0, 0, 1, 1], [], []>} : vector<128x8xbf16>, vector<8x128xbf16>, vector<128x128xf32> -> vector<128x128xf32>
    %19 = arith.addf %15, %18 : vector<128x128xf32>
    %c0_11 = arith.constant 0 : index
    %c0_12 = arith.constant 0 : index
    %20 = vector.load %arg8[%c0_11, %c0_12] : memref<1x128xf32, #tpu.memory_space<vmem>>, vector<1x128xf32>
    %21 = vector.broadcast %20 : vector<1x128xf32> to vector<128x128xf32>
    %22 = arith.addf %19, %21 : vector<128x128xf32>
    %23 = arith.negf %22 : vector<128x128xf32>
    %24 = math.exp %23 : vector<128x128xf32>
    %cst_13 = arith.constant 1.000000e+00 : f32
    %25 = vector.broadcast %cst_13 : f32 to vector<128x128xf32>
    %26 = arith.addf %25, %24 : vector<128x128xf32>
    %27 = arith.divf %25, %26 : vector<128x128xf32>
    %28 = arith.mulf %22, %27 : vector<128x128xf32>
    %29 = arith.truncf %28 : vector<128x128xf32> to vector<128x128xbf16>
    %c0_14 = arith.constant 0 : index
    %c0_15 = arith.constant 0 : index
    %30 = vector.load %arg9[%c0_14, %c0_15] : memref<128x128xbf16, #tpu.memory_space<vmem>>, vector<128x128xbf16>
    %cst_16 = arith.constant dense<0.000000e+00> : vector<128x128xf32>
    %31 = tpu.matmul %29, %30, %cst_16 {dimension_numbers = #tpu.dot_dimension_numbers<[1], [0], [0], [1], [0, 0, 1, 1], [], []>} : vector<128x128xbf16>, vector<128x128xbf16>, vector<128x128xf32> -> vector<128x128xf32>
    %c0_17 = arith.constant 0 : index
    %c0_18 = arith.constant 0 : index
    %32 = vector.load %arg10[%c0_17, %c0_18] : memref<1x128xf32, #tpu.memory_space<vmem>>, vector<1x128xf32>
    %33 = vector.broadcast %32 : vector<1x128xf32> to vector<128x128xf32>
    %34 = arith.addf %31, %33 : vector<128x128xf32>
    %35 = arith.negf %34 : vector<128x128xf32>
    %36 = math.exp %35 : vector<128x128xf32>
    %cst_19 = arith.constant 1.000000e+00 : f32
    %37 = vector.broadcast %cst_19 : f32 to vector<128x128xf32>
    %38 = arith.addf %37, %36 : vector<128x128xf32>
    %39 = arith.divf %37, %38 : vector<128x128xf32>
    %40 = arith.mulf %34, %39 : vector<128x128xf32>
    %c0_20 = arith.constant 0 : index
    %c0_21 = arith.constant 0 : index
    %41 = vector.load %arg11[%c0_20, %c0_21] : memref<1x128xf32, #tpu.memory_space<vmem>>, vector<1x128xf32>
    %42 = vector.broadcast %41 : vector<1x128xf32> to vector<128x128xf32>
    %43 = arith.mulf %40, %42 : vector<128x128xf32>
    %cst_22 = arith.constant dense<0.000000e+00> : vector<128xf32>
    %44 = vector.multi_reduction <add>, %43, %cst_22 [1] : vector<128x128xf32> to vector<128xf32>
    %45 = vector.shape_cast %44 : vector<128xf32> to vector<128x1xf32>
    %c0_23 = arith.constant 0 : index
    %c0_24 = arith.constant 0 : index
    %46 = vector.load %arg12[%c0_23, %c0_24] : memref<1x1xf32, #tpu.memory_space<vmem>>, vector<1x1xf32>
    %47 = vector.broadcast %46 : vector<1x1xf32> to vector<128x1xf32>
    %48 = arith.addf %45, %47 : vector<128x1xf32>
    %49 = arith.negf %48 : vector<128x1xf32>
    %50 = math.exp %49 : vector<128x1xf32>
    %cst_25 = arith.constant 1.000000e+00 : f32
    %51 = vector.broadcast %cst_25 : f32 to vector<128x1xf32>
    %52 = arith.addf %51, %50 : vector<128x1xf32>
    %53 = arith.divf %51, %52 : vector<128x1xf32>
    %54 = vector.broadcast %53 : vector<128x1xf32> to vector<128x128xf32>
    %55 = arith.mulf %40, %54 : vector<128x128xf32>
    %56 = arith.truncf %55 : vector<128x128xf32> to vector<128x128xbf16>
    %57 = tpu.iota {dimensions = array<i32: 0>} : vector<16x128xi32>
    %c0_26 = arith.constant 0 : index
    %c0_27 = arith.constant 0 : index
    %58 = vector.load %arg4[%c0_26, %c0_27] : memref<1x128xi32, #tpu.memory_space<vmem>>, vector<1x128xi32>
    %59 = vector.broadcast %58 : vector<1x128xi32> to vector<16x128xi32>
    %60 = arith.cmpi eq, %59, %57 : vector<16x128xi32>
    %61 = arith.extui %60 : vector<16x128xi1> to vector<16x128xi32>
    %62 = arith.sitofp %61 : vector<16x128xi32> to vector<16x128xf32>
    %63 = arith.truncf %62 : vector<16x128xf32> to vector<16x128xbf16>
    %c0_28 = arith.constant 0 : index
    %c0_29 = arith.constant 0 : index
    %c0_30 = arith.constant 0 : index
    %64 = vector.load %arg13[%c0_28, %c0_29, %c0_30] : memref<1x16x128xf32, #tpu.memory_space<vmem>>, vector<1x16x128xf32>
    %65 = vector.shape_cast %64 : vector<1x16x128xf32> to vector<16x128xf32>
    %cst_31 = arith.constant dense<0.000000e+00> : vector<16x128xf32>
    %66 = tpu.matmul %63, %56, %cst_31 {dimension_numbers = #tpu.dot_dimension_numbers<[1], [0], [0], [1], [0, 0, 1, 1], [], []>} : vector<16x128xbf16>, vector<128x128xbf16>, vector<16x128xf32> -> vector<16x128xf32>
    %67 = arith.addf %65, %66 : vector<16x128xf32>
    %c0_32 = arith.constant 0 : index
    %c0_33 = arith.constant 0 : index
    %c0_34 = arith.constant 0 : index
    %68 = vector.load %arg13[%c0_32, %c0_33, %c0_34] : memref<1x16x128xf32, #tpu.memory_space<vmem>>, vector<1x16x128xf32>
    %69 = vector.shape_cast %68 : vector<1x16x128xf32> to vector<16x128xf32>
    %70 = vector.shape_cast %67 : vector<16x128xf32> to vector<1x16x128xf32>
    tpu.vector_store %arg13[%c0_32, %c0_33, %c0_34], %70 {strides = array<i32>} : memref<1x16x128xf32, #tpu.memory_space<vmem>>, vector<1x16x128xf32>,
    return
  }
  func.func @transform_0(%arg0: i32, %arg1: i32) -> (i32, i32) {
    %c1_i32 = arith.constant 1 : i32
    %0 = arith.muli %arg0, %c1_i32 : i32
    %1 = arith.addi %0, %arg1 : i32
    %c0_i32 = arith.constant 0 : i32
    %c0_i32_0 = arith.constant 0 : i32
    return %1, %c0_i32 : i32, i32
  }
  func.func @transform_1(%arg0: i32, %arg1: i32) -> (i32, i32) {
    %c1_i32 = arith.constant 1 : i32
    %0 = arith.muli %arg0, %c1_i32 : i32
    %1 = arith.addi %0, %arg1 : i32
    %c0_i32 = arith.constant 0 : i32
    %c0_i32_0 = arith.constant 0 : i32
    return %1, %c0_i32 : i32, i32
  }
  func.func @transform_2(%arg0: i32, %arg1: i32) -> (i32, i32) {
    %c1_i32 = arith.constant 1 : i32
    %0 = arith.muli %arg0, %c1_i32 : i32
    %1 = arith.addi %0, %arg1 : i32
    %c0_i32 = arith.constant 0 : i32
    %c0_i32_0 = arith.constant 0 : i32
    return %c0_i32, %1 : i32, i32
  }
  func.func @transform_3(%arg0: i32, %arg1: i32) -> (i32, i32) {
    %c1_i32 = arith.constant 1 : i32
    %0 = arith.muli %arg0, %c1_i32 : i32
    %1 = arith.addi %0, %arg1 : i32
    %c0_i32 = arith.constant 0 : i32
    %c0_i32_0 = arith.constant 0 : i32
    return %1, %c0_i32 : i32, i32
  }
  func.func @transform_4(%arg0: i32, %arg1: i32) -> (i32, i32) {
    %c0_i32 = arith.constant 0 : i32
    %c0_i32_0 = arith.constant 0 : i32
    %c0_i32_1 = arith.constant 0 : i32
    return %c0_i32, %c0_i32_0 : i32, i32
  }
  func.func @transform_5(%arg0: i32, %arg1: i32) -> (i32, i32) {
    %c0_i32 = arith.constant 0 : i32
    %c0_i32_0 = arith.constant 0 : i32
    %c0_i32_1 = arith.constant 0 : i32
    return %c0_i32, %c0_i32_0 : i32, i32
  }
  func.func @transform_6(%arg0: i32, %arg1: i32) -> (i32, i32) {
    %c0_i32 = arith.constant 0 : i32
    %c0_i32_0 = arith.constant 0 : i32
    %c0_i32_1 = arith.constant 0 : i32
    return %c0_i32, %c0_i32_0 : i32, i32
  }
  func.func @transform_7(%arg0: i32, %arg1: i32) -> (i32, i32) {
    %c0_i32 = arith.constant 0 : i32
    %c0_i32_0 = arith.constant 0 : i32
    %c0_i32_1 = arith.constant 0 : i32
    return %c0_i32, %c0_i32_0 : i32, i32
  }
  func.func @transform_8(%arg0: i32, %arg1: i32) -> (i32, i32) {
    %c0_i32 = arith.constant 0 : i32
    %c0_i32_0 = arith.constant 0 : i32
    %c0_i32_1 = arith.constant 0 : i32
    return %c0_i32, %c0_i32_0 : i32, i32
  }
  func.func @transform_9(%arg0: i32, %arg1: i32) -> (i32, i32) {
    %c0_i32 = arith.constant 0 : i32
    %c0_i32_0 = arith.constant 0 : i32
    %c0_i32_1 = arith.constant 0 : i32
    return %c0_i32, %c0_i32_0 : i32, i32
  }
  func.func @transform_10(%arg0: i32, %arg1: i32) -> (i32, i32) {
    %c0_i32 = arith.constant 0 : i32
    %c0_i32_0 = arith.constant 0 : i32
    %c0_i32_1 = arith.constant 0 : i32
    return %c0_i32, %c0_i32_0 : i32, i32
  }
  func.func @transform_11(%arg0: i32, %arg1: i32) -> (i32, i32, i32) {
    %c0_i32 = arith.constant 0 : i32
    %c0_i32_0 = arith.constant 0 : i32
    %c0_i32_1 = arith.constant 0 : i32
    return %arg0, %c0_i32, %c0_i32_0 : i32, i32, i32
  }
}

</mosaic_0001>

<llo_original>
// kernel: tpu_custom_call.1
$region0: #{tpu_custom_call.1}
  #allocation0 [shape = 'u32[]', space=smem, size = 0x4, offset = 0x4, fixed_abs, tag = 'smem constant byte address 0x4 - core index']
  #allocation1 [shape = 'u32[144,128]{1,0:T(1,128)}', space=vmem, size = 0x12000, scoped, tag = 'internal scratch']
  #allocation2 [shape = 'f32[1,1]{1,0:T(1,128)S(1)}', space=vmem, size = 0x200, scoped, tag = 'scoped memory for tpu_custom_call.1']
  %s0 = inlined_call_operand.vmem [shape: s32[128,1], index: 0, kind: input, shape index: {}]
  %s1 = inlined_call_operand.vmem [shape: s32[128,1], index: 1, kind: input, shape index: {}]
  %s2 = inlined_call_operand.vmem [shape: s32[1,128], index: 2, kind: input, shape index: {}]
  %s3 = inlined_call_operand.vmem [shape: bf16[128,8], index: 3, kind: input, shape index: {}]
  %s4 = inlined_call_operand.vmem [shape: bf16[32,128], index: 4, kind: input, shape index: {}]
  %s5 = inlined_call_operand.vmem [shape: bf16[8,128], index: 5, kind: input, shape index: {}]
  %s6 = inlined_call_operand.vmem [shape: f32[1,128], index: 6, kind: input, shape index: {}]
  %s7 = inlined_call_operand.vmem [shape: bf16[128,128], index: 7, kind: input, shape index: {}]
  %s8 = inlined_call_operand.vmem [shape: f32[1,128], index: 8, kind: input, shape index: {}]
  %s9 = inlined_call_operand.vmem [shape: f32[1,128], index: 9, kind: input, shape index: {}]
  %s10 = inlined_call_operand.<no memory space> [shape: f32[1,1], index: 10, kind: input, shape index: {}]
  %s11 = inlined_call_operand.hbm [shape: f32[1,16,128], index: 11, kind: output, shape index: {}]
  %s12 = sld [smem:[#allocation0]]
  $region58: #{tpu_custom_call.1} parent=0
    _
  %s14 = ssub.s32 1, %s12
  %s15 = scalar_select 0, %s14, %s12
  %v16 = vstv %s10
  %17 = vst [vmem:[#allocation2] sm:$0x1] %v16
  $region1: #{tpu_custom_call.1} parent=0
    #allocation3 [shape = 'u8[8192]{0}', space=vmem, size = 0x2000, scoped, tag = 'output window, operand 0, single buffered']
    #allocation4 [shape = 's32[1]{0}', space=sflag, size = 0x4, scoped, tag = 'scoped memory for tpu_custom_call.1']
    %18 = vsyncpa [#allocation4], 0
    // Predicated region
    $region2: #{tpu_custom_call.1} parent=1 // pred_check
      _
    $region3: #{tpu_custom_call.1} parent=1 // pred_check_branch
      %20 = sbr.rel (0) target = $region5
    $region4: #{tpu_custom_call.1} parent=1 // pred_region
      %s21 = sadd.s32 0, 0
      %s22 = smul.u32 16, %s21
      %p23 = scmp.lt.s32.totalorder %s22, 15
      %s24 = scalar_select %p23, %s22, 15
      %s25 = smul.addr %s24, 8
      %s26 = scalar_lea.vmem %s0, %s25
      %s27 = sadd.s32 0, 0
      %s28 = smul.u32 16, %s27
    $region5: #{tpu_custom_call.1} parent=1 // pred_fallthru
      _
    // Predicated region
    $region6: #{tpu_custom_call.1} parent=1 // pred_check
      _
    $region7: #{tpu_custom_call.1} parent=1 // pred_check_branch
      %30 = sbr.rel (0) target = $region9
    $region8: #{tpu_custom_call.1} parent=1 // pred_region
      %s31 = sadd.s32 0, 0
      %s32 = smul.u32 16, %s31
      %p33 = scmp.lt.s32.totalorder %s32, 15
      %s34 = scalar_select %p33, %s32, 15
      %s35 = smul.addr %s34, 8
      %s36 = scalar_lea.vmem %s1, %s35
      %s37 = sadd.s32 0, 0
      %s38 = smul.u32 16, %s37
    $region9: #{tpu_custom_call.1} parent=1 // pred_fallthru
      _
    // Predicated region
    $region10: #{tpu_custom_call.1} parent=1 // pred_check
      _
    $region11: #{tpu_custom_call.1} parent=1 // pred_check_branch
      %40 = sbr.rel (0) target = $region13
    $region12: #{tpu_custom_call.1} parent=1 // pred_region
      %s41 = sadd.s32 0, 0
      %p42 = scmp.lt.s32.totalorder %s41, 0
      %s43 = scalar_select %p42, %s41, 0
      %s44 = scalar_lea.vmem %s2, %s43
      %s45 = sadd.s32 0, 0
    $region13: #{tpu_custom_call.1} parent=1 // pred_fallthru
      _
    // Predicated region
    $region14: #{tpu_custom_call.1} parent=1 // pred_check
      _
    $region15: #{tpu_custom_call.1} parent=1 // pred_check_branch
      %47 = sbr.rel (0) target = $region17
    $region16: #{tpu_custom_call.1} parent=1 // pred_region
      %s48 = sadd.s32 0, 0
      %s49 = smul.u32 16, %s48
      %p50 = scmp.lt.s32.totalorder %s49, 15
      %s51 = scalar_select %p50, %s49, 15
      %s52 = smul.addr %s51, 4
      %s53 = scalar_lea.vmem %s3, %s52
      %s54 = sadd.s32 0, 0
      %s55 = smul.u32 16, %s54
    $region17: #{tpu_custom_call.1} parent=1 // pred_fallthru
      _
    // Predicated region
    $region18: #{tpu_custom_call.1} parent=1 // pred_check
      _
    $region19: #{tpu_custom_call.1} parent=1 // pred_check_branch
      %57 = sbr.rel (0) target = $region21
    $region20: #{tpu_custom_call.1} parent=1 // pred_region
      _
    $region21: #{tpu_custom_call.1} parent=1 // pred_fallthru
      _
    // Predicated region
    $region22: #{tpu_custom_call.1} parent=1 // pred_check
      _
    $region23: #{tpu_custom_call.1} parent=1 // pred_check_branch
      %59 = sbr.rel (0) target = $region25
    $region24: #{tpu_custom_call.1} parent=1 // pred_region
      _
    $region25: #{tpu_custom_call.1} parent=1 // pred_fallthru
      _
    // Predicated region
    $region26: #{tpu_custom_call.1} parent=1 // pred_check
      _
    $region27: #{tpu_custom_call.1} parent=1 // pred_check_branch
      %61 = sbr.rel (0) target = $region29
    $region28: #{tpu_custom_call.1} parent=1 // pred_region
      _
    $region29: #{tpu_custom_call.1} parent=1 // pred_fallthru
      _
    // Predicated region
    $region30: #{tpu_custom_call.1} parent=1 // pred_check
      _
    $region31: #{tpu_custom_call.1} parent=1 // pred_check_branch
      %63 = sbr.rel (0) target = $region33
    $region32: #{tpu_custom_call.1} parent=1 // pred_region
      _
    $region33: #{tpu_custom_call.1} parent=1 // pred_fallthru
      _
    // Predicated region
    $region34: #{tpu_custom_call.1} parent=1 // pred_check
      _
    $region35: #{tpu_custom_call.1} parent=1 // pred_check_branch
      %65 = sbr.rel (0) target = $region37
    $region36: #{tpu_custom_call.1} parent=1 // pred_region
      _
    $region37: #{tpu_custom_call.1} parent=1 // pred_fallthru
      _
    // Predicated region
    $region38: #{tpu_custom_call.1} parent=1 // pred_check
      _
    $region39: #{tpu_custom_call.1} parent=1 // pred_check_branch
      %67 = sbr.rel (0) target = $region41
    $region40: #{tpu_custom_call.1} parent=1 // pred_region
      _
    $region41: #{tpu_custom_call.1} parent=1 // pred_fallthru
      _
    // Predicated region
    $region42: #{tpu_custom_call.1} parent=1 // pred_check
      _
    $region43: #{tpu_custom_call.1} parent=1 // pred_check_branch
      %69 = sbr.rel (0) target = $region45
    $region44: #{tpu_custom_call.1} parent=1 // pred_region
      _
    $region45: #{tpu_custom_call.1} parent=1 // pred_fallthru
      _
    %s70 = sadd.s32 0, 0
    %s71 = smul.u32 16, %s70
    %p72 = scmp.lt.s32.totalorder %s71, 15
    %s73 = scalar_select %p72, %s71, 15
    %s74 = smul.addr %s73, 8
    %s75 = scalar_lea.vmem %s0, %s74
    %s76 = sadd.s32 0, 0
    %s77 = smul.u32 16, %s76
    %p78 = scmp.lt.s32.totalorder %s77, 15
    %s79 = scalar_select %p78, %s77, 15
    %s80 = smul.addr %s79, 8
    %s81 = scalar_lea.vmem %s1, %s80
    %s82 = sadd.s32 0, 0
    %p83 = scmp.lt.s32.totalorder %s82, 0
    %s84 = scalar_select %p83, %s82, 0
    %s85 = scalar_lea.vmem %s2, %s84
    %s86 = sadd.s32 0, 0
    %s87 = smul.u32 16, %s86
    %p88 = scmp.lt.s32.totalorder %s87, 15
    %s89 = scalar_select %p88, %s87, 15
    %s90 = smul.addr %s89, 4
    %s91 = scalar_lea.vmem %s3, %s90
    %s92 = sadd.s32 0, 0
    %s93 = smul.u32 16, %s92
    %p94 = scmp.lt.s32.totalorder %s93, 15
    %s95 = scalar_select %p94, %s93, 15
    %s96 = smul.addr %s95, 8
    %s97 = scalar_lea.vmem %s0, %s96
    %s98 = sadd.s32 0, 0
    %s99 = smul.u32 16, %s98
    %s100 = sadd.s32 0, 0
    %s101 = smul.u32 16, %s100
    %p102 = scmp.lt.s32.totalorder %s101, 15
    %s103 = scalar_select %p102, %s101, 15
    %s104 = smul.addr %s103, 8
    %s105 = scalar_lea.vmem %s1, %s104
    %s106 = sadd.s32 0, 0
    %s107 = smul.u32 16, %s106
    %s108 = sadd.s32 0, 0
    %p109 = scmp.lt.s32.totalorder %s108, 0
    %s110 = scalar_select %p109, %s108, 0
    %s111 = scalar_lea.vmem %s2, %s110
    %s112 = sadd.s32 0, 0
    %s113 = sadd.s32 0, 0
    %s114 = smul.u32 16, %s113
    %p115 = scmp.lt.s32.totalorder %s114, 15
    %s116 = scalar_select %p115, %s114, 15
    %s117 = smul.addr %s116, 4
    %s118 = scalar_lea.vmem %s3, %s117
    %s119 = sadd.s32 0, 0
    %s120 = smul.u32 16, %s119
    %p122 = scmp.eq.s32.totalorder 0, 0
    // Predicated region
    $region46: #{tpu_custom_call.1} parent=1 // pred_check
      %p123 = pneg %p122
    $region47: #{tpu_custom_call.1} parent=1 // pred_check_branch
      %125 = sbr.rel (%p123) target = $region49
    $region48: #{tpu_custom_call.1} parent=1 // pred_region
      %126 = vst [vmem:[#allocation3] sm:$0xff] 0.0
      %127 = vst [vmem:[#allocation3 + $0x8] sm:$0xff] 0.0
    $region49: #{tpu_custom_call.1} parent=1 // pred_fallthru
      _
    %v128 = vld [vmem:[%s97] sm:$0xff]
    %v129 = vld [vmem:[%s97 + $0x8] sm:$0xff]
    %v130 = vld [vmem:[%s97 + $0x10] sm:$0xff]
    %v131 = vld [vmem:[%s97 + $0x18] sm:$0xff]
    %v132 = vld [vmem:[%s97 + $0x20] sm:$0xff]
    %v133 = vld [vmem:[%s97 + $0x28] sm:$0xff]
    %v134 = vld [vmem:[%s97 + $0x30] sm:$0xff]
    %v135 = vld [vmem:[%s97 + $0x38] sm:$0xff]
    %v136 = vld [vmem:[%s97 + $0x40] sm:$0xff]
    %v137 = vld [vmem:[%s97 + $0x48] sm:$0xff]
    %v138 = vld [vmem:[%s97 + $0x50] sm:$0xff]
    %v139 = vld [vmem:[%s97 + $0x58] sm:$0xff]
    %v140 = vld [vmem:[%s97 + $0x60] sm:$0xff]
    %v141 = vld [vmem:[%s97 + $0x68] sm:$0xff]
    %v142 = vld [vmem:[%s97 + $0x70] sm:$0xff]
    %v143 = vld [vmem:[%s97 + $0x78] sm:$0xff]
    %v144 = vld [vmem:[%s105] sm:$0xff]
    %v145 = vld [vmem:[%s105 + $0x8] sm:$0xff]
    %v146 = vld [vmem:[%s105 + $0x10] sm:$0xff]
    %v147 = vld [vmem:[%s105 + $0x18] sm:$0xff]
    %v148 = vld [vmem:[%s105 + $0x20] sm:$0xff]
    %v149 = vld [vmem:[%s105 + $0x28] sm:$0xff]
    %v150 = vld [vmem:[%s105 + $0x30] sm:$0xff]
    %v151 = vld [vmem:[%s105 + $0x38] sm:$0xff]
    %v152 = vld [vmem:[%s105 + $0x40] sm:$0xff]
    %v153 = vld [vmem:[%s105 + $0x48] sm:$0xff]
    %v154 = vld [vmem:[%s105 + $0x50] sm:$0xff]
    %v155 = vld [vmem:[%s105 + $0x58] sm:$0xff]
    %v156 = vld [vmem:[%s105 + $0x60] sm:$0xff]
    %v157 = vld [vmem:[%s105 + $0x68] sm:$0xff]
    %v158 = vld [vmem:[%s105 + $0x70] sm:$0xff]
    %v159 = vld [vmem:[%s105 + $0x78] sm:$0xff]
    %v160 = vlaneseq
    %v161 = vand.u32 %v160, 127
    %162 = vset.pattern.permute.xlu0 0
    %163 = vperm.xlu0 %162, %v128
    %v164 = vpop.permute.xlu0 %163
    %165 = vset.pattern.permute.xlu0 0
    %166 = vperm.xlu0 %165, %v129
    %v167 = vpop.permute.xlu0 %166
    %168 = vset.pattern.permute.xlu0 0
    %169 = vperm.xlu0 %168, %v130
    %v170 = vpop.permute.xlu0 %169
    %171 = vset.pattern.permute.xlu0 0
    %172 = vperm.xlu0 %171, %v131
    %v173 = vpop.permute.xlu0 %172
    %174 = vset.pattern.permute.xlu0 0
    %175 = vperm.xlu0 %174, %v132
    %v176 = vpop.permute.xlu0 %175
    %177 = vset.pattern.permute.xlu0 0
    %178 = vperm.xlu0 %177, %v133
    %v179 = vpop.permute.xlu0 %178
    %180 = vset.pattern.permute.xlu0 0
    %181 = vperm.xlu0 %180, %v134
    %v182 = vpop.permute.xlu0 %181
    %183 = vset.pattern.permute.xlu0 0
    %184 = vperm.xlu0 %183, %v135
    %v185 = vpop.permute.xlu0 %184
    %186 = vset.pattern.permute.xlu0 0
    %187 = vperm.xlu0 %186, %v136
    %v188 = vpop.permute.xlu0 %187
    %189 = vset.pattern.permute.xlu0 0
    %190 = vperm.xlu0 %189, %v137
    %v191 = vpop.permute.xlu0 %190
    %192 = vset.pattern.permute.xlu0 0
    %193 = vperm.xlu0 %192, %v138
    %v194 = vpop.permute.xlu0 %193
    %195 = vset.pattern.permute.xlu0 0
    %196 = vperm.xlu0 %195, %v139
    %v197 = vpop.permute.xlu0 %196
    %198 = vset.pattern.permute.xlu0 0
    %199 = vperm.xlu0 %198, %v140
    %v200 = vpop.permute.xlu0 %199
    %201 = vset.pattern.permute.xlu0 0
    %202 = vperm.xlu0 %201, %v141
    %v203 = vpop.permute.xlu0 %202
    %204 = vset.pattern.permute.xlu0 0
    %205 = vperm.xlu0 %204, %v142
    %v206 = vpop.permute.xlu0 %205
    %207 = vset.pattern.permute.xlu0 0
    %208 = vperm.xlu0 %207, %v143
    %v209 = vpop.permute.xlu0 %208
    %vm210 = vcmp.eq.s32.totalorder %v164, %v161
    %vm211 = vcmp.eq.s32.totalorder %v167, %v161
    %vm212 = vcmp.eq.s32.totalorder %v170, %v161
    %vm213 = vcmp.eq.s32.totalorder %v173, %v161
    %vm214 = vcmp.eq.s32.totalorder %v176, %v161
    %vm215 = vcmp.eq.s32.totalorder %v179, %v161
    %vm216 = vcmp.eq.s32.totalorder %v182, %v161
    %vm217 = vcmp.eq.s32.totalorder %v185, %v161
    %vm218 = vcmp.eq.s32.totalorder %v188, %v161
    %vm219 = vcmp.eq.s32.totalorder %v191, %v161
    %vm220 = vcmp.eq.s32.totalorder %v194, %v161
    %vm221 = vcmp.eq.s32.totalorder %v197, %v161
    %vm222 = vcmp.eq.s32.totalorder %v200, %v161
    %vm223 = vcmp.eq.s32.totalorder %v203, %v161
    %vm224 = vcmp.eq.s32.totalorder %v206, %v161
    %vm225 = vcmp.eq.s32.totalorder %v209, %v161
    %226 = vset.pattern.permute.xlu0 0
    %227 = vperm.xlu0 %226, %v144
    %v228 = vpop.permute.xlu0 %227
    %229 = vset.pattern.permute.xlu0 0
    %230 = vperm.xlu0 %229, %v145
    %v231 = vpop.permute.xlu0 %230
    %232 = vset.pattern.permute.xlu0 0
    %233 = vperm.xlu0 %232, %v146
    %v234 = vpop.permute.xlu0 %233
    %235 = vset.pattern.permute.xlu0 0
    %236 = vperm.xlu0 %235, %v147
    %v237 = vpop.permute.xlu0 %236
    %238 = vset.pattern.permute.xlu0 0
    %239 = vperm.xlu0 %238, %v148
    %v240 = vpop.permute.xlu0 %239
    %241 = vset.pattern.permute.xlu0 0
    %242 = vperm.xlu0 %241, %v149
    %v243 = vpop.permute.xlu0 %242
    %244 = vset.pattern.permute.xlu0 0
    %245 = vperm.xlu0 %244, %v150
    %v246 = vpop.permute.xlu0 %245
    %247 = vset.pattern.permute.xlu0 0
    %248 = vperm.xlu0 %247, %v151
    %v249 = vpop.permute.xlu0 %248
    %250 = vset.pattern.permute.xlu0 0
    %251 = vperm.xlu0 %250, %v152
    %v252 = vpop.permute.xlu0 %251
    %253 = vset.pattern.permute.xlu0 0
    %254 = vperm.xlu0 %253, %v153
    %v255 = vpop.permute.xlu0 %254
    %256 = vset.pattern.permute.xlu0 0
    %257 = vperm.xlu0 %256, %v154
    %v258 = vpop.permute.xlu0 %257
    %259 = vset.pattern.permute.xlu0 0
    %260 = vperm.xlu0 %259, %v155
    %v261 = vpop.permute.xlu0 %260
    %262 = vset.pattern.permute.xlu0 0
    %263 = vperm.xlu0 %262, %v156
    %v264 = vpop.permute.xlu0 %263
    %265 = vset.pattern.permute.xlu0 0
    %266 = vperm.xlu0 %265, %v157
    %v267 = vpop.permute.xlu0 %266
    %268 = vset.pattern.permute.xlu0 0
    %269 = vperm.xlu0 %268, %v158
    %v270 = vpop.permute.xlu0 %269
    %271 = vset.pattern.permute.xlu0 0
    %272 = vperm.xlu0 %271, %v159
    %v273 = vpop.permute.xlu0 %272
    %vm274 = vcmp.eq.s32.totalorder %v228, %v161
    %vm275 = vcmp.eq.s32.totalorder %v231, %v161
    %vm276 = vcmp.eq.s32.totalorder %v234, %v161
    %vm277 = vcmp.eq.s32.totalorder %v237, %v161
    %vm278 = vcmp.eq.s32.totalorder %v240, %v161
    %vm279 = vcmp.eq.s32.totalorder %v243, %v161
    %vm280 = vcmp.eq.s32.totalorder %v246, %v161
    %vm281 = vcmp.eq.s32.totalorder %v249, %v161
    %vm282 = vcmp.eq.s32.totalorder %v252, %v161
    %vm283 = vcmp.eq.s32.totalorder %v255, %v161
    %vm284 = vcmp.eq.s32.totalorder %v258, %v161
    %vm285 = vcmp.eq.s32.totalorder %v261, %v161
    %vm286 = vcmp.eq.s32.totalorder %v264, %v161
    %vm287 = vcmp.eq.s32.totalorder %v267, %v161
    %vm288 = vcmp.eq.s32.totalorder %v270, %v161
    %vm289 = vcmp.eq.s32.totalorder %v273, %v161
    %vm290 = vmor %vm210, %vm274
    %vm291 = vmor %vm211, %vm275
    %vm292 = vmor %vm212, %vm276
    %vm293 = vmor %vm213, %vm277
    %vm294 = vmor %vm214, %vm278
    %vm295 = vmor %vm215, %vm279
    %vm296 = vmor %vm216, %vm280
    %vm297 = vmor %vm217, %vm281
    %vm298 = vmor %vm218, %vm282
    %vm299 = vmor %vm219, %vm283
    %vm300 = vmor %vm220, %vm284
    %vm301 = vmor %vm221, %vm285
    %vm302 = vmor %vm222, %vm286
    %vm303 = vmor %vm223, %vm287
    %vm304 = vmor %vm224, %vm288
    %vm305 = vmor %vm225, %vm289
    %v306 = vsel %vm290, 1, 0
    %v307 = vsel %vm291, 1, 0
    %v308 = vsel %vm292, 1, 0
    %v309 = vsel %vm293, 1, 0
    %v310 = vsel %vm294, 1, 0
    %v311 = vsel %vm295, 1, 0
    %v312 = vsel %vm296, 1, 0
    %v313 = vsel %vm297, 1, 0
    %v314 = vsel %vm298, 1, 0
    %v315 = vsel %vm299, 1, 0
    %v316 = vsel %vm300, 1, 0
    %v317 = vsel %vm301, 1, 0
    %v318 = vsel %vm302, 1, 0
    %v319 = vsel %vm303, 1, 0
    %v320 = vsel %vm304, 1, 0
    %v321 = vsel %vm305, 1, 0
    %v322 = vcvt.s32.f32 %v306
    %v323 = vcvt.s32.f32 %v307
    %v324 = vcvt.s32.f32 %v308
    %v325 = vcvt.s32.f32 %v309
    %v326 = vcvt.s32.f32 %v310
    %v327 = vcvt.s32.f32 %v311
    %v328 = vcvt.s32.f32 %v312
    %v329 = vcvt.s32.f32 %v313
    %v330 = vcvt.s32.f32 %v314
    %v331 = vcvt.s32.f32 %v315
    %v332 = vcvt.s32.f32 %v316
    %v333 = vcvt.s32.f32 %v317
    %v334 = vcvt.s32.f32 %v318
    %v335 = vcvt.s32.f32 %v319
    %v336 = vcvt.s32.f32 %v320
    %v337 = vcvt.s32.f32 %v321
    %v338 = vpack.c.bf16 %v323, %v322
    %v339 = vpack.c.bf16 %v325, %v324
    %v340 = vpack.c.bf16 %v327, %v326
    %v341 = vpack.c.bf16 %v329, %v328
    %v342 = vpack.c.bf16 %v331, %v330
    %v343 = vpack.c.bf16 %v333, %v332
    %v344 = vpack.c.bf16 %v335, %v334
    %v345 = vpack.c.bf16 %v337, %v336
    %v346 = vld [vmem:[%s4] sm:$0xf]
    %v347 = vld [vmem:[%s4 + $0x4] sm:$0xf]
    %v348 = vld [vmem:[%s4 + $0x8] sm:$0xf]
    %v349 = vld [vmem:[%s4 + $0xc] sm:$0xf]
    %v350 = vld [vmem:[%s118] sm:$0xf]
    %v351 = vld [vmem:[%s118 + $0x4] sm:$0xf]
    %v352 = vld [vmem:[%s118 + $0x8] sm:$0xf]
    %v353 = vld [vmem:[%s118 + $0xc] sm:$0xf]
    %v354 = vld [vmem:[%s118 + $0x10] sm:$0xf]
    %v355 = vld [vmem:[%s118 + $0x14] sm:$0xf]
    %v356 = vld [vmem:[%s118 + $0x18] sm:$0xf]
    %v357 = vld [vmem:[%s118 + $0x1c] sm:$0xf]
    %v358 = vld [vmem:[%s118 + $0x20] sm:$0xf]
    %v359 = vld [vmem:[%s118 + $0x24] sm:$0xf]
    %v360 = vld [vmem:[%s118 + $0x28] sm:$0xf]
    %v361 = vld [vmem:[%s118 + $0x2c] sm:$0xf]
    %v362 = vld [vmem:[%s118 + $0x30] sm:$0xf]
    %v363 = vld [vmem:[%s118 + $0x34] sm:$0xf]
    %v364 = vld [vmem:[%s118 + $0x38] sm:$0xf]
    %v365 = vld [vmem:[%s118 + $0x3c] sm:$0xf]
    %v366 = vld [vmem:[%s5] sm:$0xf]
    %v383 = vunpack.c.l.b16 %v350
    %v384 = vunpack.c.l.b16 %v351
    %v385 = vunpack.c.l.b16 %v352
    %v386 = vunpack.c.l.b16 %v353
    %v387 = vunpack.c.l.b16 %v354
    %v388 = vunpack.c.l.b16 %v355
    %v389 = vunpack.c.l.b16 %v356
    %v390 = vunpack.c.l.b16 %v357
    %v391 = vunpack.c.l.b16 %v358
    %v392 = vunpack.c.l.b16 %v359
    %v393 = vunpack.c.l.b16 %v360
    %v394 = vunpack.c.l.b16 %v361
    %v395 = vunpack.c.l.b16 %v362
    %v396 = vunpack.c.l.b16 %v363
    %v397 = vunpack.c.l.b16 %v364
    %v398 = vunpack.c.l.b16 %v365
    %v399 = vpack.c.b16 %v384, %v383
    %v400 = vpack.c.b16 %v386, %v385
    %v401 = vpack.c.b16 %v388, %v387
    %v402 = vpack.c.b16 %v390, %v389
    %v403 = vpack.c.b16 %v392, %v391
    %v404 = vpack.c.b16 %v394, %v393
    %v405 = vpack.c.b16 %v396, %v395
    %v406 = vpack.c.b16 %v398, %v397
    %vm407 = vcmask 64512
    %v409 = vsel %vm407, %v399, 0
    %v412 = vsel %vm407, %v400, 0
    %v415 = vsel %vm407, %v401, 0
    %v418 = vsel %vm407, %v402, 0
    %v421 = vsel %vm407, %v403, 0
    %v424 = vsel %vm407, %v404, 0
    %v427 = vsel %vm407, %v405, 0
    %v430 = vsel %vm407, %v406, 0
    %vm432 = vcmask 1043456
    %v434 = vsel %vm432, %v366, 0
    %436 = vmatprep.subr.bf16.mxu0 0
    %437 = vmatpush1.bf16.msra.mxu0 0
    %438 = vmatprep.subr.bf16.mxu0 0
    %439 = vmatpush1.bf16.msra.mxu0 0
    %440 = vmatprep.subr.bf16.mxu0 0
    %441 = vmatpush1.bf16.msra.mxu0 0
    %442 = vmatprep.subr.bf16.mxu0 0
    %443 = vmatpush1.bf16.msra.mxu0 0
    %444 = vmatprep.subr.bf16.mxu0 0
    %445 = vmatpush1.bf16.msra.mxu0 0
    %446 = vmatprep.subr.bf16.mxu0 0
    %447 = vmatpush1.bf16.msra.mxu0 0
    %448 = vmatprep.subr.bf16.mxu0 0
    %449 = vmatpush1.bf16.msra.mxu0 0
    %450 = vmatprep.subr.bf16.mxu0 0
    %451 = vmatpush1.bf16.msra.mxu0 %v434
    %452 = vmatprep.subr.bf16.mxu0 0
    %453 = vmatpush2.bf16.msra.mxu0 0
    %454 = vmatprep.subr.bf16.mxu0 0
    %455 = vmatpush2.bf16.msra.mxu0 0
    %456 = vmatprep.subr.bf16.mxu0 0
    %457 = vmatpush2.bf16.msra.mxu0 0
    %458 = vmatprep.subr.bf16.mxu0 0
    %459 = vmatpush2.bf16.msra.mxu0 0
    %460 = vmatprep.subr.bf16.mxu0 0
    %461 = vmatpush2.bf16.msra.mxu0 0
    %462 = vmatprep.subr.bf16.mxu0 0
    %463 = vmatpush2.bf16.msra.mxu0 0
    %464 = vmatprep.subr.bf16.mxu0 0
    %465 = vmatpush2.bf16.msra.mxu0 0
    %466 = vmatprep.subr.bf16.mxu0 0
    %467 = vmatpush2.bf16.msra.mxu0 0
    %468 = vmatprep.mubr.bf16.mxu0 0
    %469 = vmatmul.mubr.bf16.gmra.mxu0 %v409
    %v470 = vpop.f32.mrf.mxu0
    %v471 = vadd.f32 0.0, %v470
    %v472 = vpop.f32.mrf.mxu0
    %v473 = vpop.f32.mrf.mxu0
    %v474 = vadd.f32 0.0, %v473
    %v475 = vpop.f32.mrf.mxu0
    %476 = vmatprep.mubr.bf16.mxu0 0
    %477 = vmatmul.mubr.bf16.gmra.mxu0 %v412
    %v478 = vpop.f32.mrf.mxu0
    %v479 = vadd.f32 0.0, %v478
    %v480 = vpop.f32.mrf.mxu0
    %v481 = vpop.f32.mrf.mxu0
    %v482 = vadd.f32 0.0, %v481
    %v483 = vpop.f32.mrf.mxu0
    %484 = vmatprep.mubr.bf16.mxu0 0
    %485 = vmatmul.mubr.bf16.gmra.mxu0 %v415
    %v486 = vpop.f32.mrf.mxu0
    %v487 = vadd.f32 0.0, %v486
    %v488 = vpop.f32.mrf.mxu0
    %v489 = vpop.f32.mrf.mxu0
    %v490 = vadd.f32 0.0, %v489
    %v491 = vpop.f32.mrf.mxu0
    %492 = vmatprep.mubr.bf16.mxu0 0
    %493 = vmatmul.mubr.bf16.gmra.mxu0 %v418
    %v494 = vpop.f32.mrf.mxu0
    %v495 = vadd.f32 0.0, %v494
    %v496 = vpop.f32.mrf.mxu0
    %v497 = vpop.f32.mrf.mxu0
    %v498 = vadd.f32 0.0, %v497
    %v499 = vpop.f32.mrf.mxu0
    %500 = vmatprep.mubr.bf16.mxu0 0
    %501 = vmatmul.mubr.bf16.gmra.mxu0 %v421
    %v502 = vpop.f32.mrf.mxu0
    %v503 = vadd.f32 0.0, %v502
    %v504 = vpop.f32.mrf.mxu0
    %v505 = vpop.f32.mrf.mxu0
    %v506 = vadd.f32 0.0, %v505
    %v507 = vpop.f32.mrf.mxu0
    %508 = vmatprep.mubr.bf16.mxu0 0
    %509 = vmatmul.mubr.bf16.gmra.mxu0 %v424
    %v510 = vpop.f32.mrf.mxu0
    %v511 = vadd.f32 0.0, %v510
    %v512 = vpop.f32.mrf.mxu0
    %v513 = vpop.f32.mrf.mxu0
    %v514 = vadd.f32 0.0, %v513
    %v515 = vpop.f32.mrf.mxu0
    %516 = vmatprep.mubr.bf16.mxu0 0
    %517 = vmatmul.mubr.bf16.gmra.mxu0 %v427
    %v518 = vpop.f32.mrf.mxu0
    %v519 = vadd.f32 0.0, %v518
    %v520 = vpop.f32.mrf.mxu0
    %v521 = vpop.f32.mrf.mxu0
    %v522 = vadd.f32 0.0, %v521
    %v523 = vpop.f32.mrf.mxu0
    %524 = vmatprep.mubr.bf16.mxu0 0
    %525 = vmatmul.mubr.bf16.gmra.mxu0 %v430
    %v526 = vpop.f32.mrf.mxu0
    %v527 = vadd.f32 0.0, %v526
    %v528 = vpop.f32.mrf.mxu0
    %v529 = vpop.f32.mrf.mxu0
    %v530 = vadd.f32 0.0, %v529
    %v531 = vpop.f32.mrf.mxu0
    %532 = vdwg.mxu0
    %v537 = vunpack.c.l.b16 %v346
    %v538 = vunpack.c.l.b16 %v347
    %v539 = vunpack.c.l.b16 %v348
    %v540 = vunpack.c.l.b16 %v349
    %v541 = vpack.c.b16 %v538, %v537
    %v542 = vpack.c.b16 %v540, %v539
    %vm545 = vcmask 261120
    %v547 = vsel %vm545, %v338, 0
    %v550 = vsel %vm545, %v339, 0
    %v553 = vsel %vm545, %v340, 0
    %v556 = vsel %vm545, %v341, 0
    %v559 = vsel %vm545, %v342, 0
    %v562 = vsel %vm545, %v343, 0
    %v565 = vsel %vm545, %v344, 0
    %v568 = vsel %vm545, %v345, 0
    %570 = vmatprep.subr.bf16.mxu0 0
    %571 = vmatpush1.bf16.msra.mxu0 0
    %572 = vmatprep.subr.bf16.mxu0 0
    %573 = vmatpush1.bf16.msra.mxu0 0
    %574 = vmatprep.subr.bf16.mxu0 0
    %575 = vmatpush1.bf16.msra.mxu0 0
    %576 = vmatprep.subr.bf16.mxu0 0
    %577 = vmatpush1.bf16.msra.mxu0 0
    %578 = vmatprep.subr.bf16.mxu0 0
    %579 = vmatpush1.bf16.msra.mxu0 0
    %580 = vmatprep.subr.bf16.mxu0 0
    %581 = vmatpush1.bf16.msra.mxu0 0
    %582 = vmatprep.subr.bf16.mxu0 0
    %583 = vmatpush1.bf16.msra.mxu0 %v542
    %584 = vmatprep.subr.bf16.mxu0 0
    %585 = vmatpush1.bf16.msra.mxu0 %v541
    %586 = vmatprep.subr.bf16.mxu0 0
    %587 = vmatpush2.bf16.msra.mxu0 0
    %588 = vmatprep.subr.bf16.mxu0 0
    %589 = vmatpush2.bf16.msra.mxu0 0
    %590 = vmatprep.subr.bf16.mxu0 0
    %591 = vmatpush2.bf16.msra.mxu0 0
    %592 = vmatprep.subr.bf16.mxu0 0
    %593 = vmatpush2.bf16.msra.mxu0 0
    %594 = vmatprep.subr.bf16.mxu0 0
    %595 = vmatpush2.bf16.msra.mxu0 0
    %596 = vmatprep.subr.bf16.mxu0 0
    %597 = vmatpush2.bf16.msra.mxu0 0
    %598 = vmatprep.subr.bf16.mxu0 0
    %599 = vmatpush2.bf16.msra.mxu0 0
    %600 = vmatprep.subr.bf16.mxu0 0
    %601 = vmatpush2.bf16.msra.mxu0 0
    %602 = vmatprep.mubr.bf16.mxu0 0
    %603 = vmatmul.mubr.bf16.gmra.mxu0 %v547
    %v604 = vpop.f32.mrf.mxu0
    %v605 = vadd.f32 %v471, %v604
    %v606 = vpop.f32.mrf.mxu0
    %v607 = vpop.f32.mrf.mxu0
    %v608 = vadd.f32 %v474, %v607
    %v609 = vpop.f32.mrf.mxu0
    %610 = vmatprep.mubr.bf16.mxu0 0
    %611 = vmatmul.mubr.bf16.gmra.mxu0 %v550
    %v612 = vpop.f32.mrf.mxu0
    %v613 = vadd.f32 %v479, %v612
    %v614 = vpop.f32.mrf.mxu0
    %v615 = vpop.f32.mrf.mxu0
    %v616 = vadd.f32 %v482, %v615
    %v617 = vpop.f32.mrf.mxu0
    %618 = vmatprep.mubr.bf16.mxu0 0
    %619 = vmatmul.mubr.bf16.gmra.mxu0 %v553
    %v620 = vpop.f32.mrf.mxu0
    %v621 = vadd.f32 %v487, %v620
    %v622 = vpop.f32.mrf.mxu0
    %v623 = vpop.f32.mrf.mxu0
    %v624 = vadd.f32 %v490, %v623
    %v625 = vpop.f32.mrf.mxu0
    %626 = vmatprep.mubr.bf16.mxu0 0
    %627 = vmatmul.mubr.bf16.gmra.mxu0 %v556
    %v628 = vpop.f32.mrf.mxu0
    %v629 = vadd.f32 %v495, %v628
    %v630 = vpop.f32.mrf.mxu0
    %v631 = vpop.f32.mrf.mxu0
    %v632 = vadd.f32 %v498, %v631
    %v633 = vpop.f32.mrf.mxu0
    %634 = vmatprep.mubr.bf16.mxu0 0
    %635 = vmatmul.mubr.bf16.gmra.mxu0 %v559
    %v636 = vpop.f32.mrf.mxu0
    %v637 = vadd.f32 %v503, %v636
    %v638 = vpop.f32.mrf.mxu0
    %v639 = vpop.f32.mrf.mxu0
    %v640 = vadd.f32 %v506, %v639
    %v641 = vpop.f32.mrf.mxu0
    %642 = vmatprep.mubr.bf16.mxu0 0
    %643 = vmatmul.mubr.bf16.gmra.mxu0 %v562
    %v644 = vpop.f32.mrf.mxu0
    %v645 = vadd.f32 %v511, %v644
    %v646 = vpop.f32.mrf.mxu0
    %v647 = vpop.f32.mrf.mxu0
    %v648 = vadd.f32 %v514, %v647
    %v649 = vpop.f32.mrf.mxu0
    %650 = vmatprep.mubr.bf16.mxu0 0
    %651 = vmatmul.mubr.bf16.gmra.mxu0 %v565
    %v652 = vpop.f32.mrf.mxu0
    %v653 = vadd.f32 %v519, %v652
    %v654 = vpop.f32.mrf.mxu0
    %v655 = vpop.f32.mrf.mxu0
    %v656 = vadd.f32 %v522, %v655
    %v657 = vpop.f32.mrf.mxu0
    %658 = vmatprep.mubr.bf16.mxu0 0
    %659 = vmatmul.mubr.bf16.gmra.mxu0 %v568
    %v660 = vpop.f32.mrf.mxu0
    %v661 = vadd.f32 %v527, %v660
    %v662 = vpop.f32.mrf.mxu0
    %v663 = vpop.f32.mrf.mxu0
    %v664 = vadd.f32 %v530, %v663
    %v665 = vpop.f32.mrf.mxu0
    %666 = vdwg.mxu0
    %v667 = vld [vmem:[%s6] sm:$0x1]
    %v669 = vlaneseq
    %v670 = vshrl.u32 %v669, 7
    %v671 = vsub.s32 0, %v670
    %v672 = vrot.slane %v667, %v671
    %v674 = vadd.f32 %v605, %v672
    %v675 = vadd.f32 %v608, %v672
    %v676 = vadd.f32 %v613, %v672
    %v677 = vadd.f32 %v616, %v672
    %v678 = vadd.f32 %v621, %v672
    %v679 = vadd.f32 %v624, %v672
    %v680 = vadd.f32 %v629, %v672
    %v681 = vadd.f32 %v632, %v672
    %v682 = vadd.f32 %v637, %v672
    %v683 = vadd.f32 %v640, %v672
    %v684 = vadd.f32 %v645, %v672
    %v685 = vadd.f32 %v648, %v672
    %v686 = vadd.f32 %v653, %v672
    %v687 = vadd.f32 %v656, %v672
    %v688 = vadd.f32 %v661, %v672
    %v689 = vadd.f32 %v664, %v672
    %v690 = vxor.u32 %v674, 2147483648
    %v691 = vxor.u32 %v675, 2147483648
    %v692 = vxor.u32 %v676, 2147483648
    %v693 = vxor.u32 %v677, 2147483648
    %v694 = vxor.u32 %v678, 2147483648
    %v695 = vxor.u32 %v679, 2147483648
    %v696 = vxor.u32 %v680, 2147483648
    %v697 = vxor.u32 %v681, 2147483648
    %v698 = vxor.u32 %v682, 2147483648
    %v699 = vxor.u32 %v683, 2147483648
    %v700 = vxor.u32 %v684, 2147483648
    %v701 = vxor.u32 %v685, 2147483648
    %v702 = vxor.u32 %v686, 2147483648
    %v703 = vxor.u32 %v687, 2147483648
    %v704 = vxor.u32 %v688, 2147483648
    %v705 = vxor.u32 %v689, 2147483648
    %v706 = vmul.f32 %v690, 1.442695
    %v707 = vpow.pop %v706
    %v708 = vmul.f32 %v691, 1.442695
    %v709 = vpow.pop %v708
    %v710 = vmul.f32 %v692, 1.442695
    %v711 = vpow.pop %v710
    %v712 = vmul.f32 %v693, 1.442695
    %v713 = vpow.pop %v712
    %v714 = vmul.f32 %v694, 1.442695
    %v715 = vpow.pop %v714
    %v716 = vmul.f32 %v695, 1.442695
    %v717 = vpow.pop %v716
    %v718 = vmul.f32 %v696, 1.442695
    %v719 = vpow.pop %v718
    %v720 = vmul.f32 %v697, 1.442695
    %v721 = vpow.pop %v720
    %v722 = vmul.f32 %v698, 1.442695
    %v723 = vpow.pop %v722
    %v724 = vmul.f32 %v699, 1.442695
    %v725 = vpow.pop %v724
    %v726 = vmul.f32 %v700, 1.442695
    %v727 = vpow.pop %v726
    %v728 = vmul.f32 %v701, 1.442695
    %v729 = vpow.pop %v728
    %v730 = vmul.f32 %v702, 1.442695
    %v731 = vpow.pop %v730
    %v732 = vmul.f32 %v703, 1.442695
    %v733 = vpow.pop %v732
    %v734 = vmul.f32 %v704, 1.442695
    %v735 = vpow.pop %v734
    %v736 = vmul.f32 %v705, 1.442695
    %v737 = vpow.pop %v736
    %v738 = vadd.f32 %v707, 1.0
    %v739 = vadd.f32 %v709, 1.0
    %v740 = vadd.f32 %v711, 1.0
    %v741 = vadd.f32 %v713, 1.0
    %v742 = vadd.f32 %v715, 1.0
    %v743 = vadd.f32 %v717, 1.0
    %v744 = vadd.f32 %v719, 1.0
    %v745 = vadd.f32 %v721, 1.0
    %v746 = vadd.f32 %v723, 1.0
    %v747 = vadd.f32 %v725, 1.0
    %v748 = vadd.f32 %v727, 1.0
    %v749 = vadd.f32 %v729, 1.0
    %v750 = vadd.f32 %v731, 1.0
    %v751 = vadd.f32 %v733, 1.0
    %v752 = vadd.f32 %v735, 1.0
    %v753 = vadd.f32 %v737, 1.0
    %v754 = vrcp.pop %v738
    %v755 = vmul.f32 1.0, %v754
    %v756 = vrcp.pop %v739
    %v757 = vmul.f32 1.0, %v756
    %v758 = vrcp.pop %v740
    %v759 = vmul.f32 1.0, %v758
    %v760 = vrcp.pop %v741
    %v761 = vmul.f32 1.0, %v760
    %v762 = vrcp.pop %v742
    %v763 = vmul.f32 1.0, %v762
    %v764 = vrcp.pop %v743
    %v765 = vmul.f32 1.0, %v764
    %v766 = vrcp.pop %v744
    %v767 = vmul.f32 1.0, %v766
    %v768 = vrcp.pop %v745
    %v769 = vmul.f32 1.0, %v768
    %v770 = vrcp.pop %v746
    %v771 = vmul.f32 1.0, %v770
    %v772 = vrcp.pop %v747
    %v773 = vmul.f32 1.0, %v772
    %v774 = vrcp.pop %v748
    %v775 = vmul.f32 1.0, %v774
    %v776 = vrcp.pop %v749
    %v777 = vmul.f32 1.0, %v776
    %v778 = vrcp.pop %v750
    %v779 = vmul.f32 1.0, %v778
    %v780 = vrcp.pop %v751
    %v781 = vmul.f32 1.0, %v780
    %v782 = vrcp.pop %v752
    %v783 = vmul.f32 1.0, %v782
    %v784 = vrcp.pop %v753
    %v785 = vmul.f32 1.0, %v784
    %v786 = vmul.f32 %v674, %v755
    %v787 = vmul.f32 %v675, %v757
    %v788 = vmul.f32 %v676, %v759
    %v789 = vmul.f32 %v677, %v761
    %v790 = vmul.f32 %v678, %v763
    %v791 = vmul.f32 %v679, %v765
    %v792 = vmul.f32 %v680, %v767
    %v793 = vmul.f32 %v681, %v769
    %v794 = vmul.f32 %v682, %v771
    %v795 = vmul.f32 %v683, %v773
    %v796 = vmul.f32 %v684, %v775
    %v797 = vmul.f32 %v685, %v777
    %v798 = vmul.f32 %v686, %v779
    %v799 = vmul.f32 %v687, %v781
    %v800 = vmul.f32 %v688, %v783
    %v801 = vmul.f32 %v689, %v785
    %v802 = vpack.c.bf16 %v787, %v786
    %v803 = vpack.c.bf16 %v789, %v788
    %v804 = vpack.c.bf16 %v791, %v790
    %v805 = vpack.c.bf16 %v793, %v792
    %v806 = vpack.c.bf16 %v795, %v794
    %v807 = vpack.c.bf16 %v797, %v796
    %v808 = vpack.c.bf16 %v799, %v798
    %v809 = vpack.c.bf16 %v801, %v800
    %v810 = vld [vmem:[%s7] sm:$0xf]
    %v811 = vld [vmem:[%s7 + $0x4] sm:$0xf]
    %v812 = vld [vmem:[%s7 + $0x8] sm:$0xf]
    %v813 = vld [vmem:[%s7 + $0xc] sm:$0xf]
    %v814 = vld [vmem:[%s7 + $0x10] sm:$0xf]
    %v815 = vld [vmem:[%s7 + $0x14] sm:$0xf]
    %v816 = vld [vmem:[%s7 + $0x18] sm:$0xf]
    %v817 = vld [vmem:[%s7 + $0x1c] sm:$0xf]
    %v818 = vld [vmem:[%s7 + $0x20] sm:$0xf]
    %v819 = vld [vmem:[%s7 + $0x24] sm:$0xf]
    %v820 = vld [vmem:[%s7 + $0x28] sm:$0xf]
    %v821 = vld [vmem:[%s7 + $0x2c] sm:$0xf]
    %v822 = vld [vmem:[%s7 + $0x30] sm:$0xf]
    %v823 = vld [vmem:[%s7 + $0x34] sm:$0xf]
    %v824 = vld [vmem:[%s7 + $0x38] sm:$0xf]
    %v825 = vld [vmem:[%s7 + $0x3c] sm:$0xf]
    %v826 = vld [vmem:[%s8] sm:$0x1]
    %v828 = vlaneseq
    %v829 = vshrl.u32 %v828, 7
    %v830 = vsub.s32 0, %v829
    %v831 = vrot.slane %v826, %v830
    %v849 = vunpack.c.l.b16 %v810
    %v850 = vunpack.c.l.b16 %v811
    %v851 = vunpack.c.l.b16 %v812
    %v852 = vunpack.c.l.b16 %v813
    %v853 = vunpack.c.l.b16 %v814
    %v854 = vunpack.c.l.b16 %v815
    %v855 = vunpack.c.l.b16 %v816
    %v856 = vunpack.c.l.b16 %v817
    %v857 = vunpack.c.l.b16 %v818
    %v858 = vunpack.c.l.b16 %v819
    %v859 = vunpack.c.l.b16 %v820
    %v860 = vunpack.c.l.b16 %v821
    %v861 = vunpack.c.l.b16 %v822
    %v862 = vunpack.c.l.b16 %v823
    %v863 = vunpack.c.l.b16 %v824
    %v864 = vunpack.c.l.b16 %v825
    %v865 = vpack.c.b16 %v850, %v849
    %v866 = vpack.c.b16 %v852, %v851
    %v867 = vpack.c.b16 %v854, %v853
    %v868 = vpack.c.b16 %v856, %v855
    %v869 = vpack.c.b16 %v858, %v857
    %v870 = vpack.c.b16 %v860, %v859
    %v871 = vpack.c.b16 %v862, %v861
    %v872 = vpack.c.b16 %v864, %v863
    %881 = vmatprep.subr.bf16.mxu0 0
    %882 = vmatpush1.bf16.msra.mxu0 %v872
    %883 = vmatprep.subr.bf16.mxu0 0
    %884 = vmatpush1.bf16.msra.mxu0 %v871
    %885 = vmatprep.subr.bf16.mxu0 0
    %886 = vmatpush1.bf16.msra.mxu0 %v870
    %887 = vmatprep.subr.bf16.mxu0 0
    %888 = vmatpush1.bf16.msra.mxu0 %v869
    %889 = vmatprep.subr.bf16.mxu0 0
    %890 = vmatpush1.bf16.msra.mxu0 %v868
    %891 = vmatprep.subr.bf16.mxu0 0
    %892 = vmatpush1.bf16.msra.mxu0 %v867
    %893 = vmatprep.subr.bf16.mxu0 0
    %894 = vmatpush1.bf16.msra.mxu0 %v866
    %895 = vmatprep.subr.bf16.mxu0 0
    %896 = vmatpush1.bf16.msra.mxu0 %v865
    %897 = vmatprep.subr.bf16.mxu0 0
    %898 = vmatpush2.bf16.msra.mxu0 0
    %899 = vmatprep.subr.bf16.mxu0 0
    %900 = vmatpush2.bf16.msra.mxu0 0
    %901 = vmatprep.subr.bf16.mxu0 0
    %902 = vmatpush2.bf16.msra.mxu0 0
    %903 = vmatprep.subr.bf16.mxu0 0
    %904 = vmatpush2.bf16.msra.mxu0 0
    %905 = vmatprep.subr.bf16.mxu0 0
    %906 = vmatpush2.bf16.msra.mxu0 0
    %907 = vmatprep.subr.bf16.mxu0 0
    %908 = vmatpush2.bf16.msra.mxu0 0
    %909 = vmatprep.subr.bf16.mxu0 0
    %910 = vmatpush2.bf16.msra.mxu0 0
    %911 = vmatprep.subr.bf16.mxu0 0
    %912 = vmatpush2.bf16.msra.mxu0 0
    %913 = vmatprep.mubr.bf16.mxu0 0
    %914 = vmatmul.mubr.bf16.gmra.mxu0 %v802
    %v915 = vpop.f32.mrf.mxu0
    %v916 = vadd.f32 %v831, %v915
    %v917 = vpop.f32.mrf.mxu0
    %v918 = vpop.f32.mrf.mxu0
    %v919 = vadd.f32 %v831, %v918
    %v920 = vpop.f32.mrf.mxu0
    %921 = vmatprep.mubr.bf16.mxu0 0
    %922 = vmatmul.mubr.bf16.gmra.mxu0 %v803
    %v923 = vpop.f32.mrf.mxu0
    %v924 = vadd.f32 %v831, %v923
    %v925 = vpop.f32.mrf.mxu0
    %v926 = vpop.f32.mrf.mxu0
    %v927 = vadd.f32 %v831, %v926
    %v928 = vpop.f32.mrf.mxu0
    %929 = vmatprep.mubr.bf16.mxu0 0
    %930 = vmatmul.mubr.bf16.gmra.mxu0 %v804
    %v931 = vpop.f32.mrf.mxu0
    %v932 = vadd.f32 %v831, %v931
    %v933 = vpop.f32.mrf.mxu0
    %v934 = vpop.f32.mrf.mxu0
    %v935 = vadd.f32 %v831, %v934
    %v936 = vpop.f32.mrf.mxu0
    %937 = vmatprep.mubr.bf16.mxu0 0
    %938 = vmatmul.mubr.bf16.gmra.mxu0 %v805
    %v939 = vpop.f32.mrf.mxu0
    %v940 = vadd.f32 %v831, %v939
    %v941 = vpop.f32.mrf.mxu0
    %v942 = vpop.f32.mrf.mxu0
    %v943 = vadd.f32 %v831, %v942
    %v944 = vpop.f32.mrf.mxu0
    %945 = vmatprep.mubr.bf16.mxu0 0
    %946 = vmatmul.mubr.bf16.gmra.mxu0 %v806
    %v947 = vpop.f32.mrf.mxu0
    %v948 = vadd.f32 %v831, %v947
    %v949 = vpop.f32.mrf.mxu0
    %v950 = vpop.f32.mrf.mxu0
    %v951 = vadd.f32 %v831, %v950
    %v952 = vpop.f32.mrf.mxu0
    %953 = vmatprep.mubr.bf16.mxu0 0
    %954 = vmatmul.mubr.bf16.gmra.mxu0 %v807
    %v955 = vpop.f32.mrf.mxu0
    %v956 = vadd.f32 %v831, %v955
    %v957 = vpop.f32.mrf.mxu0
    %v958 = vpop.f32.mrf.mxu0
    %v959 = vadd.f32 %v831, %v958
    %v960 = vpop.f32.mrf.mxu0
    %961 = vmatprep.mubr.bf16.mxu0 0
    %962 = vmatmul.mubr.bf16.gmra.mxu0 %v808
    %v963 = vpop.f32.mrf.mxu0
    %v964 = vadd.f32 %v831, %v963
    %v965 = vpop.f32.mrf.mxu0
    %v966 = vpop.f32.mrf.mxu0
    %v967 = vadd.f32 %v831, %v966
    %v968 = vpop.f32.mrf.mxu0
    %969 = vmatprep.mubr.bf16.mxu0 0
    %970 = vmatmul.mubr.bf16.gmra.mxu0 %v809
    %v971 = vpop.f32.mrf.mxu0
    %v972 = vadd.f32 %v831, %v971
    %v973 = vpop.f32.mrf.mxu0
    %v974 = vpop.f32.mrf.mxu0
    %v975 = vadd.f32 %v831, %v974
    %v976 = vpop.f32.mrf.mxu0
    %977 = vdwg.mxu0
    %v978 = vxor.u32 %v916, 2147483648
    %v979 = vxor.u32 %v919, 2147483648
    %v980 = vxor.u32 %v924, 2147483648
    %v981 = vxor.u32 %v927, 2147483648
    %v982 = vxor.u32 %v932, 2147483648
    %v983 = vxor.u32 %v935, 2147483648
    %v984 = vxor.u32 %v940, 2147483648
    %v985 = vxor.u32 %v943, 2147483648
    %v986 = vxor.u32 %v948, 2147483648
    %v987 = vxor.u32 %v951, 2147483648
    %v988 = vxor.u32 %v956, 2147483648
    %v989 = vxor.u32 %v959, 2147483648
    %v990 = vxor.u32 %v964, 2147483648
    %v991 = vxor.u32 %v967, 2147483648
    %v992 = vxor.u32 %v972, 2147483648
    %v993 = vxor.u32 %v975, 2147483648
    %v994 = vmul.f32 %v978, 1.442695
    %v995 = vpow.pop %v994
    %v996 = vmul.f32 %v979, 1.442695
    %v997 = vpow.pop %v996
    %v998 = vmul.f32 %v980, 1.442695
    %v999 = vpow.pop %v998
    %v1000 = vmul.f32 %v981, 1.442695
    %v1001 = vpow.pop %v1000
    %v1002 = vmul.f32 %v982, 1.442695
    %v1003 = vpow.pop %v1002
    %v1004 = vmul.f32 %v983, 1.442695
    %v1005 = vpow.pop %v1004
    %v1006 = vmul.f32 %v984, 1.442695
    %v1007 = vpow.pop %v1006
    %v1008 = vmul.f32 %v985, 1.442695
    %v1009 = vpow.pop %v1008
    %v1010 = vmul.f32 %v986, 1.442695
    %v1011 = vpow.pop %v1010
    %v1012 = vmul.f32 %v987, 1.442695
    %v1013 = vpow.pop %v1012
    %v1014 = vmul.f32 %v988, 1.442695
    %v1015 = vpow.pop %v1014
    %v1016 = vmul.f32 %v989, 1.442695
    %v1017 = vpow.pop %v1016
    %v1018 = vmul.f32 %v990, 1.442695
    %v1019 = vpow.pop %v1018
    %v1020 = vmul.f32 %v991, 1.442695
    %v1021 = vpow.pop %v1020
    %v1022 = vmul.f32 %v992, 1.442695
    %v1023 = vpow.pop %v1022
    %v1024 = vmul.f32 %v993, 1.442695
    %v1025 = vpow.pop %v1024
    %v1026 = vadd.f32 %v995, 1.0
    %v1027 = vadd.f32 %v997, 1.0
    %v1028 = vadd.f32 %v999, 1.0
    %v1029 = vadd.f32 %v1001, 1.0
    %v1030 = vadd.f32 %v1003, 1.0
    %v1031 = vadd.f32 %v1005, 1.0
    %v1032 = vadd.f32 %v1007, 1.0
    %v1033 = vadd.f32 %v1009, 1.0
    %v1034 = vadd.f32 %v1011, 1.0
    %v1035 = vadd.f32 %v1013, 1.0
    %v1036 = vadd.f32 %v1015, 1.0
    %v1037 = vadd.f32 %v1017, 1.0
    %v1038 = vadd.f32 %v1019, 1.0
    %v1039 = vadd.f32 %v1021, 1.0
    %v1040 = vadd.f32 %v1023, 1.0
    %v1041 = vadd.f32 %v1025, 1.0
    %v1042 = vrcp.pop %v1026
    %v1043 = vmul.f32 1.0, %v1042
    %v1044 = vrcp.pop %v1027
    %v1045 = vmul.f32 1.0, %v1044
    %v1046 = vrcp.pop %v1028
    %v1047 = vmul.f32 1.0, %v1046
    %v1048 = vrcp.pop %v1029
    %v1049 = vmul.f32 1.0, %v1048
    %v1050 = vrcp.pop %v1030
    %v1051 = vmul.f32 1.0, %v1050
    %v1052 = vrcp.pop %v1031
    %v1053 = vmul.f32 1.0, %v1052
    %v1054 = vrcp.pop %v1032
    %v1055 = vmul.f32 1.0, %v1054
    %v1056 = vrcp.pop %v1033
    %v1057 = vmul.f32 1.0, %v1056
    %v1058 = vrcp.pop %v1034
    %v1059 = vmul.f32 1.0, %v1058
    %v1060 = vrcp.pop %v1035
    %v1061 = vmul.f32 1.0, %v1060
    %v1062 = vrcp.pop %v1036
    %v1063 = vmul.f32 1.0, %v1062
    %v1064 = vrcp.pop %v1037
    %v1065 = vmul.f32 1.0, %v1064
    %v1066 = vrcp.pop %v1038
    %v1067 = vmul.f32 1.0, %v1066
    %v1068 = vrcp.pop %v1039
    %v1069 = vmul.f32 1.0, %v1068
    %v1070 = vrcp.pop %v1040
    %v1071 = vmul.f32 1.0, %v1070
    %v1072 = vrcp.pop %v1041
    %v1073 = vmul.f32 1.0, %v1072
    %v1074 = vmul.f32 %v916, %v1043
    %v1075 = vmul.f32 %v919, %v1045
    %v1076 = vmul.f32 %v924, %v1047
    %v1077 = vmul.f32 %v927, %v1049
    %v1078 = vmul.f32 %v932, %v1051
    %v1079 = vmul.f32 %v935, %v1053
    %v1080 = vmul.f32 %v940, %v1055
    %v1081 = vmul.f32 %v943, %v1057
    %v1082 = vmul.f32 %v948, %v1059
    %v1083 = vmul.f32 %v951, %v1061
    %v1084 = vmul.f32 %v956, %v1063
    %v1085 = vmul.f32 %v959, %v1065
    %v1086 = vmul.f32 %v964, %v1067
    %v1087 = vmul.f32 %v967, %v1069
    %v1088 = vmul.f32 %v972, %v1071
    %v1089 = vmul.f32 %v975, %v1073
    %v1090 = vld [vmem:[%s9] sm:$0x1]
    %v1092 = vlaneseq
    %v1093 = vshrl.u32 %v1092, 7
    %v1094 = vsub.s32 0, %v1093
    %v1095 = vrot.slane %v1090, %v1094
    %v1097 = vmul.f32 %v1074, %v1095
    %v1098 = vmul.f32 %v1075, %v1095
    %v1099 = vmul.f32 %v1076, %v1095
    %v1100 = vmul.f32 %v1077, %v1095
    %v1101 = vmul.f32 %v1078, %v1095
    %v1102 = vmul.f32 %v1079, %v1095
    %v1103 = vmul.f32 %v1080, %v1095
    %v1104 = vmul.f32 %v1081, %v1095
    %v1105 = vmul.f32 %v1082, %v1095
    %v1106 = vmul.f32 %v1083, %v1095
    %v1107 = vmul.f32 %v1084, %v1095
    %v1108 = vmul.f32 %v1085, %v1095
    %v1109 = vmul.f32 %v1086, %v1095
    %v1110 = vmul.f32 %v1087, %v1095
    %v1111 = vmul.f32 %v1088, %v1095
    %v1112 = vmul.f32 %v1089, %v1095
    %1113 = vadd.xlane.f32.xlu0 %v1097
    %v1114 = vpop.xlane.xlu0 %1113
    %1115 = vadd.xlane.f32.xlu0 %v1098
    %v1116 = vpop.xlane.xlu0 %1115
    %1117 = vadd.xlane.f32.xlu0 %v1099
    %v1118 = vpop.xlane.xlu0 %1117
    %1119 = vadd.xlane.f32.xlu0 %v1100
    %v1120 = vpop.xlane.xlu0 %1119
    %1121 = vadd.xlane.f32.xlu0 %v1101
    %v1122 = vpop.xlane.xlu0 %1121
    %1123 = vadd.xlane.f32.xlu0 %v1102
    %v1124 = vpop.xlane.xlu0 %1123
    %1125 = vadd.xlane.f32.xlu0 %v1103
    %v1126 = vpop.xlane.xlu0 %1125
    %1127 = vadd.xlane.f32.xlu0 %v1104
    %v1128 = vpop.xlane.xlu0 %1127
    %1129 = vadd.xlane.f32.xlu0 %v1105
    %v1130 = vpop.xlane.xlu0 %1129
    %1131 = vadd.xlane.f32.xlu0 %v1106
    %v1132 = vpop.xlane.xlu0 %1131
    %1133 = vadd.xlane.f32.xlu0 %v1107
    %v1134 = vpop.xlane.xlu0 %1133
    %1135 = vadd.xlane.f32.xlu0 %v1108
    %v1136 = vpop.xlane.xlu0 %1135
    %1137 = vadd.xlane.f32.xlu0 %v1109
    %v1138 = vpop.xlane.xlu0 %1137
    %1139 = vadd.xlane.f32.xlu0 %v1110
    %v1140 = vpop.xlane.xlu0 %1139
    %1141 = vadd.xlane.f32.xlu0 %v1111
    %v1142 = vpop.xlane.xlu0 %1141
    %1143 = vadd.xlane.f32.xlu0 %v1112
    %v1144 = vpop.xlane.xlu0 %1143
    %v1145 = vld [vmem:[#allocation2] sm:$0x1]
    %v1147 = vlaneseq
    %v1148 = vshrl.u32 %v1147, 7
    %v1149 = vsub.s32 0, %v1148
    %v1150 = vrot.slane %v1145, %v1149
    %v1152 = vadd.f32 %v1114, %v1150
    %v1153 = vadd.f32 %v1116, %v1150
    %v1154 = vadd.f32 %v1118, %v1150
    %v1155 = vadd.f32 %v1120, %v1150
    %v1156 = vadd.f32 %v1122, %v1150
    %v1157 = vadd.f32 %v1124, %v1150
    %v1158 = vadd.f32 %v1126, %v1150
    %v1159 = vadd.f32 %v1128, %v1150
    %v1160 = vadd.f32 %v1130, %v1150
    %v1161 = vadd.f32 %v1132, %v1150
    %v1162 = vadd.f32 %v1134, %v1150
    %v1163 = vadd.f32 %v1136, %v1150
    %v1164 = vadd.f32 %v1138, %v1150
    %v1165 = vadd.f32 %v1140, %v1150
    %v1166 = vadd.f32 %v1142, %v1150
    %v1167 = vadd.f32 %v1144, %v1150
    %v1168 = vxor.u32 %v1152, 2147483648
    %v1169 = vxor.u32 %v1153, 2147483648
    %v1170 = vxor.u32 %v1154, 2147483648
    %v1171 = vxor.u32 %v1155, 2147483648
    %v1172 = vxor.u32 %v1156, 2147483648
    %v1173 = vxor.u32 %v1157, 2147483648
    %v1174 = vxor.u32 %v1158, 2147483648
    %v1175 = vxor.u32 %v1159, 2147483648
    %v1176 = vxor.u32 %v1160, 2147483648
    %v1177 = vxor.u32 %v1161, 2147483648
    %v1178 = vxor.u32 %v1162, 2147483648
    %v1179 = vxor.u32 %v1163, 2147483648
    %v1180 = vxor.u32 %v1164, 2147483648
    %v1181 = vxor.u32 %v1165, 2147483648
    %v1182 = vxor.u32 %v1166, 2147483648
    %v1183 = vxor.u32 %v1167, 2147483648
    %v1184 = vmul.f32 %v1168, 1.442695
    %v1185 = vpow.pop %v1184
    %v1186 = vmul.f32 %v1169, 1.442695
    %v1187 = vpow.pop %v1186
    %v1188 = vmul.f32 %v1170, 1.442695
    %v1189 = vpow.pop %v1188
    %v1190 = vmul.f32 %v1171, 1.442695
    %v1191 = vpow.pop %v1190
    %v1192 = vmul.f32 %v1172, 1.442695
    %v1193 = vpow.pop %v1192
    %v1194 = vmul.f32 %v1173, 1.442695
    %v1195 = vpow.pop %v1194
    %v1196 = vmul.f32 %v1174, 1.442695
    %v1197 = vpow.pop %v1196
    %v1198 = vmul.f32 %v1175, 1.442695
    %v1199 = vpow.pop %v1198
    %v1200 = vmul.f32 %v1176, 1.442695
    %v1201 = vpow.pop %v1200
    %v1202 = vmul.f32 %v1177, 1.442695
    %v1203 = vpow.pop %v1202
    %v1204 = vmul.f32 %v1178, 1.442695
    %v1205 = vpow.pop %v1204
    %v1206 = vmul.f32 %v1179, 1.442695
    %v1207 = vpow.pop %v1206
    %v1208 = vmul.f32 %v1180, 1.442695
    %v1209 = vpow.pop %v1208
    %v1210 = vmul.f32 %v1181, 1.442695
    %v1211 = vpow.pop %v1210
    %v1212 = vmul.f32 %v1182, 1.442695
    %v1213 = vpow.pop %v1212
    %v1214 = vmul.f32 %v1183, 1.442695
    %v1215 = vpow.pop %v1214
    %v1216 = vadd.f32 %v1185, 1.0
    %v1217 = vadd.f32 %v1187, 1.0
    %v1218 = vadd.f32 %v1189, 1.0
    %v1219 = vadd.f32 %v1191, 1.0
    %v1220 = vadd.f32 %v1193, 1.0
    %v1221 = vadd.f32 %v1195, 1.0
    %v1222 = vadd.f32 %v1197, 1.0
    %v1223 = vadd.f32 %v1199, 1.0
    %v1224 = vadd.f32 %v1201, 1.0
    %v1225 = vadd.f32 %v1203, 1.0
    %v1226 = vadd.f32 %v1205, 1.0
    %v1227 = vadd.f32 %v1207, 1.0
    %v1228 = vadd.f32 %v1209, 1.0
    %v1229 = vadd.f32 %v1211, 1.0
    %v1230 = vadd.f32 %v1213, 1.0
    %v1231 = vadd.f32 %v1215, 1.0
    %v1232 = vrcp.pop %v1216
    %v1233 = vmul.f32 1.0, %v1232
    %v1234 = vrcp.pop %v1217
    %v1235 = vmul.f32 1.0, %v1234
    %v1236 = vrcp.pop %v1218
    %v1237 = vmul.f32 1.0, %v1236
    %v1238 = vrcp.pop %v1219
    %v1239 = vmul.f32 1.0, %v1238
    %v1240 = vrcp.pop %v1220
    %v1241 = vmul.f32 1.0, %v1240
    %v1242 = vrcp.pop %v1221
    %v1243 = vmul.f32 1.0, %v1242
    %v1244 = vrcp.pop %v1222
    %v1245 = vmul.f32 1.0, %v1244
    %v1246 = vrcp.pop %v1223
    %v1247 = vmul.f32 1.0, %v1246
    %v1248 = vrcp.pop %v1224
    %v1249 = vmul.f32 1.0, %v1248
    %v1250 = vrcp.pop %v1225
    %v1251 = vmul.f32 1.0, %v1250
    %v1252 = vrcp.pop %v1226
    %v1253 = vmul.f32 1.0, %v1252
    %v1254 = vrcp.pop %v1227
    %v1255 = vmul.f32 1.0, %v1254
    %v1256 = vrcp.pop %v1228
    %v1257 = vmul.f32 1.0, %v1256
    %v1258 = vrcp.pop %v1229
    %v1259 = vmul.f32 1.0, %v1258
    %v1260 = vrcp.pop %v1230
    %v1261 = vmul.f32 1.0, %v1260
    %v1262 = vrcp.pop %v1231
    %v1263 = vmul.f32 1.0, %v1262
    %1265 = vset.pattern.permute.xlu0 0
    %1266 = vperm.xlu0 %1265, %v1233
    %v1267 = vpop.permute.xlu0 %1266
    %1270 = vset.pattern.permute.xlu0 0
    %1271 = vperm.xlu0 %1270, %v1235
    %v1272 = vpop.permute.xlu0 %1271
    %1275 = vset.pattern.permute.xlu0 0
    %1276 = vperm.xlu0 %1275, %v1237
    %v1277 = vpop.permute.xlu0 %1276
    %1280 = vset.pattern.permute.xlu0 0
    %1281 = vperm.xlu0 %1280, %v1239
    %v1282 = vpop.permute.xlu0 %1281
    %1285 = vset.pattern.permute.xlu0 0
    %1286 = vperm.xlu0 %1285, %v1241
    %v1287 = vpop.permute.xlu0 %1286
    %1290 = vset.pattern.permute.xlu0 0
    %1291 = vperm.xlu0 %1290, %v1243
    %v1292 = vpop.permute.xlu0 %1291
    %1295 = vset.pattern.permute.xlu0 0
    %1296 = vperm.xlu0 %1295, %v1245
    %v1297 = vpop.permute.xlu0 %1296
    %1300 = vset.pattern.permute.xlu0 0
    %1301 = vperm.xlu0 %1300, %v1247
    %v1302 = vpop.permute.xlu0 %1301
    %1305 = vset.pattern.permute.xlu0 0
    %1306 = vperm.xlu0 %1305, %v1249
    %v1307 = vpop.permute.xlu0 %1306
    %1310 = vset.pattern.permute.xlu0 0
    %1311 = vperm.xlu0 %1310, %v1251
    %v1312 = vpop.permute.xlu0 %1311
    %1315 = vset.pattern.permute.xlu0 0
    %1316 = vperm.xlu0 %1315, %v1253
    %v1317 = vpop.permute.xlu0 %1316
    %1320 = vset.pattern.permute.xlu0 0
    %1321 = vperm.xlu0 %1320, %v1255
    %v1322 = vpop.permute.xlu0 %1321
    %1325 = vset.pattern.permute.xlu0 0
    %1326 = vperm.xlu0 %1325, %v1257
    %v1327 = vpop.permute.xlu0 %1326
    %1330 = vset.pattern.permute.xlu0 0
    %1331 = vperm.xlu0 %1330, %v1259
    %v1332 = vpop.permute.xlu0 %1331
    %1335 = vset.pattern.permute.xlu0 0
    %1336 = vperm.xlu0 %1335, %v1261
    %v1337 = vpop.permute.xlu0 %1336
    %1340 = vset.pattern.permute.xlu0 0
    %1341 = vperm.xlu0 %1340, %v1263
    %v1342 = vpop.permute.xlu0 %1341
    %v1344 = vmul.f32 %v1074, %v1267
    %v1345 = vmul.f32 %v1075, %v1272
    %v1346 = vmul.f32 %v1076, %v1277
    %v1347 = vmul.f32 %v1077, %v1282
    %v1348 = vmul.f32 %v1078, %v1287
    %v1349 = vmul.f32 %v1079, %v1292
    %v1350 = vmul.f32 %v1080, %v1297
    %v1351 = vmul.f32 %v1081, %v1302
    %v1352 = vmul.f32 %v1082, %v1307
    %v1353 = vmul.f32 %v1083, %v1312
    %v1354 = vmul.f32 %v1084, %v1317
    %v1355 = vmul.f32 %v1085, %v1322
    %v1356 = vmul.f32 %v1086, %v1327
    %v1357 = vmul.f32 %v1087, %v1332
    %v1358 = vmul.f32 %v1088, %v1337
    %v1359 = vmul.f32 %v1089, %v1342
    %v1360 = vpack.c.bf16 %v1345, %v1344
    %v1361 = vpack.c.bf16 %v1347, %v1346
    %v1362 = vpack.c.bf16 %v1349, %v1348
    %v1363 = vpack.c.bf16 %v1351, %v1350
    %v1364 = vpack.c.bf16 %v1353, %v1352
    %v1365 = vpack.c.bf16 %v1355, %v1354
    %v1366 = vpack.c.bf16 %v1357, %v1356
    %v1367 = vpack.c.bf16 %v1359, %v1358
    %v1368 = vlaneseq
    %v1369 = vshrl.u32 %v1368, 7
    %v1370 = vadd.s32 %v1369, 8
    %v1371 = vld [vmem:[%s111] sm:$0x1]
    %v1372 = vlaneseq
    %v1373 = vshrl.u32 %v1372, 7
    %v1374 = vsub.s32 0, %v1373
    %v1375 = vrot.slane %v1371, %v1374
    %vm1376 = vcmp.eq.s32.totalorder %v1375, %v1369
    %vm1377 = vcmp.eq.s32.totalorder %v1375, %v1370
    %v1378 = vsel %vm1376, 1, 0
    %v1379 = vsel %vm1377, 1, 0
    %v1380 = vcvt.s32.f32 %v1378
    %v1381 = vcvt.s32.f32 %v1379
    %v1382 = vpack.c.bf16 %v1381, %v1380
    %v1383 = vld [vmem:[#allocation3] sm:$0xff]
    %v1384 = vld [vmem:[#allocation3 + $0x8] sm:$0xff]
    %1385 = vmatprep.subr.bf16.mxu0 0
    %1386 = vmatpush1.bf16.msra.mxu0 %v1367
    %1387 = vmatprep.subr.bf16.mxu0 0
    %1388 = vmatpush1.bf16.msra.mxu0 %v1366
    %1389 = vmatprep.subr.bf16.mxu0 0
    %1390 = vmatpush1.bf16.msra.mxu0 %v1365
    %1391 = vmatprep.subr.bf16.mxu0 0
    %1392 = vmatpush1.bf16.msra.mxu0 %v1364
    %1393 = vmatprep.subr.bf16.mxu0 0
    %1394 = vmatpush1.bf16.msra.mxu0 %v1363
    %1395 = vmatprep.subr.bf16.mxu0 0
    %1396 = vmatpush1.bf16.msra.mxu0 %v1362
    %1397 = vmatprep.subr.bf16.mxu0 0
    %1398 = vmatpush1.bf16.msra.mxu0 %v1361
    %1399 = vmatprep.subr.bf16.mxu0 0
    %1400 = vmatpush1.bf16.msra.mxu0 %v1360
    %1401 = vmatprep.subr.bf16.mxu0 0
    %1402 = vmatpush2.bf16.msra.mxu0 0
    %1403 = vmatprep.subr.bf16.mxu0 0
    %1404 = vmatpush2.bf16.msra.mxu0 0
    %1405 = vmatprep.subr.bf16.mxu0 0
    %1406 = vmatpush2.bf16.msra.mxu0 0
    %1407 = vmatprep.subr.bf16.mxu0 0
    %1408 = vmatpush2.bf16.msra.mxu0 0
    %1409 = vmatprep.subr.bf16.mxu0 0
    %1410 = vmatpush2.bf16.msra.mxu0 0
    %1411 = vmatprep.subr.bf16.mxu0 0
    %1412 = vmatpush2.bf16.msra.mxu0 0
    %1413 = vmatprep.subr.bf16.mxu0 0
    %1414 = vmatpush2.bf16.msra.mxu0 0
    %1415 = vmatprep.subr.bf16.mxu0 0
    %1416 = vmatpush2.bf16.msra.mxu0 0
    %1417 = vmatprep.mubr.bf16.mxu0 0
    %1418 = vmatmul.mubr.bf16.gmra.mxu0 %v1382
    %v1419 = vpop.f32.mrf.mxu0
    %v1420 = vadd.f32 0.0, %v1419
    %v1421 = vpop.f32.mrf.mxu0
    %v1422 = vpop.f32.mrf.mxu0
    %v1423 = vadd.f32 0.0, %v1422
    %v1424 = vpop.f32.mrf.mxu0
    %1425 = vdwg.mxu0
    %v1426 = vadd.f32 %v1383, %v1420
    %v1427 = vadd.f32 %v1384, %v1423
    %1428 = vst [vmem:[#allocation3] sm:$0xff] %v1426
    %1429 = vst [vmem:[#allocation3 + $0x8] sm:$0xff] %v1427
    // Predicated region
    $region50: #{tpu_custom_call.1} parent=1 // pred_check
      _
    $region51: #{tpu_custom_call.1} parent=1 // pred_check_branch
      %1431 = sbr.rel (0) target = $region53
    $region52: #{tpu_custom_call.1} parent=1 // pred_region
      %s1433 = ssub.s32 256, 256
      %1434 = vsyncadd [#allocation4], %s1433
      %s1435 = sshll.u32 [#allocation3], 4
      %s1436 = int_to_ptr.vmem [resolvable:$true] %s1435
      %1441 = dma.vmem_to_hbm [thread:$0]  %s1436, 256, %s11, [#allocation4], 128, 128, 8
    $region53: #{tpu_custom_call.1} parent=1 // pred_fallthru
      _
    // Predicated region
    $region54: #{tpu_custom_call.1} parent=1 // pred_check
      _
    $region55: #{tpu_custom_call.1} parent=1 // pred_check_branch
      %1443 = sbr.rel (0) target = $region57
    $region56: #{tpu_custom_call.1} parent=1 // pred_region
      %1444 = dma.done [#allocation4], 256
    $region57: #{tpu_custom_call.1} parent=1 // pred_fallthru
      _
    %1445 = vsyncpa [#allocation4], 1

</llo_original>
